<compile_context>
chip_gen: v7x
topology: tpu7x:2x2x1
jax: 0.10.0
libtpu: 0.0.40
codegen_flags: <defaults>
</compile_context>

<pallas_src>
import functools

import jax
import jax.numpy as jnp
from jax.experimental import pallas as pl
from jax.experimental.pallas import tpu as pltpu


def _layernorm_relu(v, gamma, beta, eps):
    """LayerNorm over channels (last dim, biased var, eps inside sqrt) + ReLU."""
    mu = jnp.mean(v, axis=-1, keepdims=True)
    var = jnp.mean(jnp.square(v - mu), axis=-1, keepdims=True)
    out = (v - mu) * jax.lax.rsqrt(var + eps) * gamma + beta
    return jnp.maximum(out, 0.0)


def _tcn_kernel(dil_ref,                 # SMEM scalar prefetch: (nb,) int32 dilations
                x_ref,                   # (1, Bt, L, C)   input sequences
                w1_ref, w2_ref,          # (1, k*C, C)     merged conv weights (this block)
                p_ref,                   # (1, 8, C) f32   [b1,g1,beta1,b2,g2,beta2,a,0]
                wo_ref, bo_ref,          # (C, C), (1, C)  output Linear
                out_ref,                 # (1, Bt, L, C)
                h_pad, o_pad,            # VMEM scratch (Bt, pad+L, C)
                *, Bt, L, C, k, pad, eps, nb):
    blk = pl.program_id(1)

    # ---- initialize the padded residual-stream scratch at the first block ----
    @pl.when(blk == 0)
    def _init():
        if pad > 0:  # static
            h_pad[:, 0:pad, :] = jnp.zeros((Bt, pad, C), h_pad.dtype)
            o_pad[:, 0:pad, :] = jnp.zeros((Bt, pad, C), o_pad.dtype)
        h_pad[:, pad:pad + L, :] = x_ref[0].astype(jnp.float32)

    d = dil_ref[blk]                                   # this block's dilation (scalar)

    params = p_ref[0].astype(jnp.float32)              # (8, C), loaded once per block
    b1, g1, be1 = params[0:1], params[1:2], params[2:3]
    b2, g2, be2 = params[3:4], params[4:5], params[5:6]
    a = params[6:7]

    def gather(src_pad, dilation, dtype):
        """Concatenate the k causally-shifted windows -> (Bt*L, k*C) in `dtype`.

        Shifts stay inside each sequence (3-D windows, no cross-sequence leak);
        rows before t=0 read the zero pad region of the scratch.
        """
        cols = []
        for j in range(k):                             # static unroll over taps
            if j == k - 1:
                start = pad                            # unshifted tap: static, aligned
            else:
                start = pad - (k - 1 - j) * dilation   # dynamic causal shift
            cols.append(src_pad[:, pl.ds(start, L), :])
        lhs = jnp.concatenate(cols, axis=-1)           # (Bt, L, k*C)
        return lhs.reshape(Bt * L, k * C).astype(dtype)

    # ---- conv1 (dilation d): one merged MXU contraction over all k taps ----
    c1 = jnp.dot(gather(h_pad, d, w1_ref.dtype), w1_ref[0],
                 preferred_element_type=jnp.float32) + b1
    o1 = _layernorm_relu(c1, g1, be1, eps)             # (Bt*L, C) f32
    o_pad[:, pad:pad + L, :] = o1.reshape(Bt, L, C).astype(o_pad.dtype)

    # ---- conv2 (dilation 2*d) ----
    c2 = jnp.dot(gather(o_pad, 2 * d, w2_ref.dtype), w2_ref[0],
                 preferred_element_type=jnp.float32) + b2
    o2 = _layernorm_relu(c2, g2, be2, eps)             # (Bt*L, C) f32

    # ---- scaled residual add (kept in f32 in the scratch) ----
    h = h_pad[:, pad:pad + L, :].reshape(Bt * L, C)
    h_new = a * o2 + h
    h_pad[:, pad:pad + L, :] = h_new.reshape(Bt, L, C)

    # ---- final nn.Linear(d_model, d_model) after the last residual block ----
    @pl.when(blk == nb - 1)
    def _finish():
        y = jnp.dot(h_new.astype(wo_ref.dtype), wo_ref[...],
                    preferred_element_type=jnp.float32)
        y = y + bo_ref[...].astype(jnp.float32)
        out_ref[0] = y.reshape(Bt, L, C).astype(out_ref.dtype)


def tcn_forward(x, kparams, *, dilations, kernel_size, eps=1e-8, block_batch=None):
    """x: (B, L, C) channel-last. kparams: kernel-layout params (to_kernel_params)."""
    B, L, C = x.shape
    nb = len(dilations)
    k = kernel_size

    # Zero-pad rows needed for the largest causal shift ((k-1) * 2 * max dilation),
    # rounded up to a sublane multiple so the static data-region slices stay aligned.
    pad = (k - 1) * 2 * max(dilations)
    if pad > 0:
        pad = ((pad + 7) // 8) * 8

    # Batch tile: aim for Bt*L >= 256 matmul rows (must divide B).
    if block_batch is None:
        block_batch = max(1, 256 // max(L, 1))
    Bt = 1
    for cand in range(min(block_batch, B), 0, -1):
        if B % cand == 0:
            Bt = cand
            break
    n_bt = B // Bt

    x4 = x.reshape(n_bt, Bt, L, C)
    dil = jnp.asarray(list(dilations), jnp.int32)

    kern = functools.partial(_tcn_kernel, Bt=Bt, L=L, C=C, k=k, pad=pad,
                             eps=eps, nb=nb)

    out = pl.pallas_call(
        kern,
        out_shape=jax.ShapeDtypeStruct((n_bt, Bt, L, C), x.dtype),
        grid_spec=pltpu.PrefetchScalarGridSpec(
            num_scalar_prefetch=1,                      # dilation table -> SMEM
            grid=(n_bt, nb),
            in_specs=[
                # x: one batch tile, resident across the whole block axis
                pl.BlockSpec((1, Bt, L, C), lambda bi, blk, d: (bi, 0, 0, 0)),
                # per-block merged conv weights: streamed (double-buffered) per block
                pl.BlockSpec((1, k * C, C), lambda bi, blk, d: (blk, 0, 0)),
                pl.BlockSpec((1, k * C, C), lambda bi, blk, d: (blk, 0, 0)),
                # per-block small params [b1,g1,beta1,b2,g2,beta2,a,pad]
                pl.BlockSpec((1, 8, C), lambda bi, blk, d: (blk, 0, 0)),
                # output Linear (loop-invariant)
                pl.BlockSpec((C, C), lambda bi, blk, d: (0, 0)),
                pl.BlockSpec((1, C), lambda bi, blk, d: (0, 0)),
            ],
            out_specs=pl.BlockSpec((1, Bt, L, C), lambda bi, blk, d: (bi, 0, 0, 0)),
            scratch_shapes=[
                pltpu.VMEM((Bt, pad + L, C), jnp.float32),  # residual stream (f32)
                pltpu.VMEM((Bt, pad + L, C), x.dtype),      # conv1 output (compute dtype)
            ],
        ),
        compiler_params=pltpu.CompilerParams(
            dimension_semantics=("parallel", "arbitrary")),
    )(dil, x4, kparams["w1"], kparams["w2"], kparams["p"],
      kparams["wo"], kparams["bo"])

    return out.reshape(B, L, C)


def to_kernel_params(torch_params, C, kernel_size):
    """Hoist ALL weight re-layout out of the kernel (done once in the wrapper)."""
    blocks = torch_params["blocks"]

    def conv_w(p, name):
        # torch (C_out, C_in, 1, k) -> (k, C_in, C_out) -> merged (k*C_in, C_out)
        w = jnp.transpose(p[name][:, :, 0, :], (2, 1, 0))
        return w.reshape(kernel_size * C, C)

    def small(p):
        rows = [p["b1"], p["g1"], p["beta1"], p["b2"], p["g2"], p["beta2"],
                jnp.broadcast_to(p["a"], (C,)), jnp.zeros((C,), jnp.float32)]
        return jnp.stack(rows).astype(jnp.float32)

    return dict(
        w1=jnp.stack([conv_w(p, "w1") for p in blocks]),   # (nb, k*C, C)
        w2=jnp.stack([conv_w(p, "w2") for p in blocks]),   # (nb, k*C, C)
        p=jnp.stack([small(p) for p in blocks]),            # (nb, 8, C) f32
        wo=torch_params["wo"].T,                             # (C_in, C_out)
        bo=torch_params["bo"].reshape(1, C),
    )


def tcn_reference(x, torch_params, dilations, kernel_size, eps=1e-8):
    """Independent pure-JAX reference using lax.conv_general_dilated."""
    def causal_conv(v, w, b, d):
        pad = (kernel_size - 1) * d
        out = jax.lax.conv_general_dilated(
            jnp.transpose(v, (0, 2, 1)), w[:, :, 0, :],
            window_strides=(1,), padding=[(pad, 0)], rhs_dilation=(d,),
            dimension_numbers=("NCH", "OIH", "NCH"))
        out = out + b[None, :, None]
        return jnp.transpose(out, (0, 2, 1))

    def ln(v, g, bta):
        mu = jnp.mean(v, axis=-1, keepdims=True)
        var = jnp.mean((v - mu) ** 2, axis=-1, keepdims=True)
        return (v - mu) / jnp.sqrt(var + eps) * g + bta

    h = x
    for blk, d in enumerate(dilations):
        p = torch_params["blocks"][blk]
        o1 = jax.nn.relu(ln(causal_conv(h, p["w1"], p["b1"], d), p["g1"], p["beta1"]))
        o2 = jax.nn.relu(ln(causal_conv(o1, p["w2"], p["b2"], 2 * d), p["g2"], p["beta2"]))
        h = p["a"] * o2 + h
    return h @ torch_params["wo"].T + torch_params["bo"]


if __name__ == "__main__":
    key = jax.random.PRNGKey(0)
    B, L, C = 4, 16, 128                    # batch, seq len, d_model (lane-dense)
    kernel_size = 3                         # TCN kwargs default
    block_num = 1
    dilations = [1, 2] * block_num          # self.dilations = dilations * block_num
    nb = len(dilations)
    eps = 1e-8

    k_x, k_wo, k_blocks = jax.random.split(key, 3)
    block_keys = jax.random.split(k_blocks, nb)

    x = jax.random.normal(k_x, (B, L, C), jnp.float32)

    blocks = []
    for i in range(nb):
        ks = jax.random.split(block_keys[i], 9)
        blocks.append(dict(
            w1=0.1 * jax.random.normal(ks[0], (C, C, 1, kernel_size), jnp.float32),
            b1=0.1 * jax.random.normal(ks[1], (C,), jnp.float32),
            g1=1.0 + 0.1 * jax.random.normal(ks[2], (C,), jnp.float32),
            beta1=0.1 * jax.random.normal(ks[3], (C,), jnp.float32),
            w2=0.1 * jax.random.normal(ks[4], (C, C, 1, kernel_size), jnp.float32),
            b2=0.1 * jax.random.normal(ks[5], (C,), jnp.float32),
            g2=1.0 + 0.1 * jax.random.normal(ks[6], (C,), jnp.float32),
            beta2=0.1 * jax.random.normal(ks[7], (C,), jnp.float32),
            a=jnp.float32(0.5) + 0.1 * jax.random.normal(ks[8], (), jnp.float32),
        ))

    torch_params = dict(
        blocks=blocks,
        wo=(1.0 / jnp.sqrt(C)) * jax.random.normal(k_wo, (C, C), jnp.float32),
        bo=jnp.full((C,), 0.1, jnp.float32),   # _init_weights: Linear bias = 0.1
    )

    kparams = to_kernel_params(torch_params, C, kernel_size)

    # block_batch=2 -> Bt=2, grid=(2, nb): exercises both the parallel batch-tile
    # axis and the per-block scratch re-initialization.
    y = tcn_forward(x, kparams, dilations=dilations, kernel_size=kernel_size,
                    eps=eps, block_batch=2)
    jax.block_until_ready(y)

    y_ref = tcn_reference(x, torch_params, dilations, kernel_size, eps)
    assert y.shape == (B, L, C)
    max_err = float(jnp.max(jnp.abs(y - y_ref)))
    assert jnp.allclose(y, y_ref, atol=1e-4, rtol=1e-4), max_err

    print("KERNEL_OK")
</pallas_src>

<mosaic_0001>
module attributes {stable_mosaic.version = 11 : i64} {
  func.func @_tcn_kernel(%arg0: i32, %arg1: i32, %arg2: memref<2xi32, #tpu.memory_space<smem>>, %arg3: memref<1x2x16x128xf32, #tpu.memory_space<vmem>>, %arg4: memref<1x384x128xf32, #tpu.memory_space<vmem>>, %arg5: memref<1x384x128xf32, #tpu.memory_space<vmem>>, %arg6: memref<1x8x128xf32, #tpu.memory_space<vmem>>, %arg7: memref<128x128xf32, #tpu.memory_space<vmem>>, %arg8: memref<1x128xf32, #tpu.memory_space<vmem>>, %arg9: memref<1x2x16x128xf32, #tpu.memory_space<vmem>>, %arg10: memref<2x24x128xf32, #tpu.memory_space<vmem>>, %arg11: memref<2x24x128xf32, #tpu.memory_space<vmem>>) attributes {dimension_semantics = [#tpu.dimension_semantics<parallel>, #tpu.dimension_semantics<arbitrary>], iteration_bounds = array<i64: 2, 2>, scalar_prefetch = 1 : i64, scratch_operands = 2 : i64, tpu.core_type = #tpu.core_type<tc>, window_params = [{transform_indices = @transform_0, window_bounds = array<i64: 1, 2, 16, 128>}, {transform_indices = @transform_1, window_bounds = array<i64: 1, 384, 128>}, {transform_indices = @transform_2, window_bounds = array<i64: 1, 384, 128>}, {transform_indices = @transform_3, window_bounds = array<i64: 1, 8, 128>}, {pipeline_mode = #tpu.pipeline_mode<synchronous>, transform_indices = @transform_4, window_bounds = array<i64: 128, 128>}, {pipeline_mode = #tpu.pipeline_mode<synchronous>, transform_indices = @transform_5, window_bounds = array<i64: 1, 128>}, {transform_indices = @transform_6, window_bounds = array<i64: 1, 2, 16, 128>}]} {
    %c0_i32 = arith.constant 0 : i32
    %0 = arith.cmpi eq, %arg1, %c0_i32 : i32
    %1 = arith.extui %0 : i1 to i32
    %c0_i32_0 = arith.constant 0 : i32
    %2 = arith.cmpi ne, %1, %c0_i32_0 : i32
    scf.if %2 {
      %cst_52 = arith.constant 0.000000e+00 : f32
      %107 = vector.broadcast %cst_52 : f32 to vector<2x8x128xf32>
      %c0_53 = arith.constant 0 : index
      %c0_54 = arith.constant 0 : index
      %c0_55 = arith.constant 0 : index
      %108 = vector.load %arg10[%c0_53, %c0_54, %c0_55] : memref<2x24x128xf32, #tpu.memory_space<vmem>>, vector<2x8x128xf32>
      tpu.vector_store %arg10[%c0_53, %c0_54, %c0_55], %107 {strides = array<i32>} : memref<2x24x128xf32, #tpu.memory_space<vmem>>, vector<2x8x128xf32>,
      %cst_56 = arith.constant 0.000000e+00 : f32
      %109 = vector.broadcast %cst_56 : f32 to vector<2x8x128xf32>
      %c0_57 = arith.constant 0 : index
      %c0_58 = arith.constant 0 : index
      %c0_59 = arith.constant 0 : index
      %110 = vector.load %arg11[%c0_57, %c0_58, %c0_59] : memref<2x24x128xf32, #tpu.memory_space<vmem>>, vector<2x8x128xf32>
      tpu.vector_store %arg11[%c0_57, %c0_58, %c0_59], %109 {strides = array<i32>} : memref<2x24x128xf32, #tpu.memory_space<vmem>>, vector<2x8x128xf32>,
      %c0_60 = arith.constant 0 : index
      %c0_61 = arith.constant 0 : index
      %c0_62 = arith.constant 0 : index
      %c0_63 = arith.constant 0 : index
      %111 = vector.load %arg3[%c0_60, %c0_61, %c0_62, %c0_63] : memref<1x2x16x128xf32, #tpu.memory_space<vmem>>, vector<1x2x16x128xf32>
      %112 = vector.shape_cast %111 : vector<1x2x16x128xf32> to vector<2x16x128xf32>
      %c0_64 = arith.constant 0 : index
      %c8_65 = arith.constant 8 : index
      %c0_66 = arith.constant 0 : index
      %113 = vector.load %arg10[%c0_64, %c8_65, %c0_66] : memref<2x24x128xf32, #tpu.memory_space<vmem>>, vector<2x16x128xf32>
      tpu.vector_store %arg10[%c0_64, %c8_65, %c0_66], %112 {strides = array<i32>} : memref<2x24x128xf32, #tpu.memory_space<vmem>>, vector<2x16x128xf32>,
    } else {
    }
    %3 = arith.index_cast %arg1 : i32 to index
    %4 = memref.load %arg2[%3] : memref<2xi32, #tpu.memory_space<smem>>
    %c0 = arith.constant 0 : index
    %c0_1 = arith.constant 0 : index
    %c0_2 = arith.constant 0 : index
    %5 = vector.load %arg6[%c0, %c0_1, %c0_2] : memref<1x8x128xf32, #tpu.memory_space<vmem>>, vector<1x8x128xf32>
    %6 = vector.shape_cast %5 : vector<1x8x128xf32> to vector<8x128xf32>
    %7 = vector.extract_strided_slice %6 {offsets = [0, 0], sizes = [1, 128], strides = [1, 1]} : vector<8x128xf32> to vector<1x128xf32>
    %8 = vector.extract_strided_slice %6 {offsets = [1, 0], sizes = [1, 128], strides = [1, 1]} : vector<8x128xf32> to vector<1x128xf32>
    %9 = vector.extract_strided_slice %6 {offsets = [2, 0], sizes = [1, 128], strides = [1, 1]} : vector<8x128xf32> to vector<1x128xf32>
    %10 = vector.extract_strided_slice %6 {offsets = [3, 0], sizes = [1, 128], strides = [1, 1]} : vector<8x128xf32> to vector<1x128xf32>
    %11 = vector.extract_strided_slice %6 {offsets = [4, 0], sizes = [1, 128], strides = [1, 1]} : vector<8x128xf32> to vector<1x128xf32>
    %12 = vector.extract_strided_slice %6 {offsets = [5, 0], sizes = [1, 128], strides = [1, 1]} : vector<8x128xf32> to vector<1x128xf32>
    %13 = vector.extract_strided_slice %6 {offsets = [6, 0], sizes = [1, 128], strides = [1, 1]} : vector<8x128xf32> to vector<1x128xf32>
    %c2_i32 = arith.constant 2 : i32
    %14 = arith.muli %c2_i32, %4 : i32
    %c8_i32 = arith.constant 8 : i32
    %15 = arith.subi %c8_i32, %14 : i32
    %c0_3 = arith.constant 0 : index
    %16 = arith.index_cast %15 : i32 to index
    %c0_4 = arith.constant 0 : index
    %17 = vector.load %arg10[%c0_3, %16, %c0_4] : memref<2x24x128xf32, #tpu.memory_space<vmem>>, vector<2x16x128xf32>
    %c1_i32 = arith.constant 1 : i32
    %18 = arith.muli %c1_i32, %4 : i32
    %c8_i32_5 = arith.constant 8 : i32
    %19 = arith.subi %c8_i32_5, %18 : i32
    %c0_6 = arith.constant 0 : index
    %20 = arith.index_cast %19 : i32 to index
    %c0_7 = arith.constant 0 : index
    %21 = vector.load %arg10[%c0_6, %20, %c0_7] : memref<2x24x128xf32, #tpu.memory_space<vmem>>, vector<2x16x128xf32>
    %c0_8 = arith.constant 0 : index
    %c8 = arith.constant 8 : index
    %c0_9 = arith.constant 0 : index
    %22 = vector.load %arg10[%c0_8, %c8, %c0_9] : memref<2x24x128xf32, #tpu.memory_space<vmem>>, vector<2x16x128xf32>
    %23 = tpu.concatenate %17, %21, %22 in 2 : vector<2x16x128xf32>, vector<2x16x128xf32>, vector<2x16x128xf32> -> vector<2x16x384xf32>
    %24 = vector.shape_cast %23 : vector<2x16x384xf32> to vector<32x384xf32>
    %c0_10 = arith.constant 0 : index
    %c0_11 = arith.constant 0 : index
    %c0_12 = arith.constant 0 : index
    %25 = vector.load %arg4[%c0_10, %c0_11, %c0_12] : memref<1x384x128xf32, #tpu.memory_space<vmem>>, vector<1x384x128xf32>
    %26 = vector.shape_cast %25 : vector<1x384x128xf32> to vector<384x128xf32>
    %cst = arith.constant dense<0.000000e+00> : vector<32x128xf32>
    %27 = tpu.matmul %24, %26, %cst {dimension_numbers = #tpu.dot_dimension_numbers<[1], [0], [0], [1], [0, 0, 1, 1], [], []>} : vector<32x384xf32>, vector<384x128xf32>, vector<32x128xf32> -> vector<32x128xf32>
    %28 = vector.broadcast %7 : vector<1x128xf32> to vector<32x128xf32>
    %29 = arith.addf %27, %28 : vector<32x128xf32>
    %cst_13 = arith.constant dense<0.000000e+00> : vector<32xf32>
    %30 = vector.multi_reduction <add>, %29, %cst_13 [1] : vector<32x128xf32> to vector<32xf32>
    %31 = vector.shape_cast %30 : vector<32xf32> to vector<32x1xf32>
    %cst_14 = arith.constant 1.280000e+02 : f32
    %32 = vector.broadcast %cst_14 : f32 to vector<32x1xf32>
    %33 = arith.divf %31, %32 : vector<32x1xf32>
    %34 = vector.broadcast %33 : vector<32x1xf32> to vector<32x128xf32>
    %35 = arith.subf %29, %34 : vector<32x128xf32>
    %36 = arith.mulf %35, %35 : vector<32x128xf32>
    %cst_15 = arith.constant dense<0.000000e+00> : vector<32xf32>
    %37 = vector.multi_reduction <add>, %36, %cst_15 [1] : vector<32x128xf32> to vector<32xf32>
    %38 = vector.shape_cast %37 : vector<32xf32> to vector<32x1xf32>
    %cst_16 = arith.constant 1.280000e+02 : f32
    %39 = vector.broadcast %cst_16 : f32 to vector<32x1xf32>
    %40 = arith.divf %38, %39 : vector<32x1xf32>
    %41 = vector.broadcast %33 : vector<32x1xf32> to vector<32x128xf32>
    %42 = arith.subf %29, %41 : vector<32x128xf32>
    %cst_17 = arith.constant 9.99999993E-9 : f32
    %43 = vector.broadcast %cst_17 : f32 to vector<32x1xf32>
    %44 = arith.addf %40, %43 : vector<32x1xf32>
    %45 = math.rsqrt %44 : vector<32x1xf32>
    %46 = vector.broadcast %45 : vector<32x1xf32> to vector<32x128xf32>
    %47 = arith.mulf %42, %46 : vector<32x128xf32>
    %48 = vector.broadcast %8 : vector<1x128xf32> to vector<32x128xf32>
    %49 = arith.mulf %47, %48 : vector<32x128xf32>
    %50 = vector.broadcast %9 : vector<1x128xf32> to vector<32x128xf32>
    %51 = arith.addf %49, %50 : vector<32x128xf32>
    %cst_18 = arith.constant 0.000000e+00 : f32
    %52 = vector.broadcast %cst_18 : f32 to vector<32x128xf32>
    %53 = arith.maximumf %51, %52 : vector<32x128xf32>
    %54 = vector.shape_cast %53 : vector<32x128xf32> to vector<2x16x128xf32>
    %c0_19 = arith.constant 0 : index
    %c8_20 = arith.constant 8 : index
    %c0_21 = arith.constant 0 : index
    %55 = vector.load %arg11[%c0_19, %c8_20, %c0_21] : memref<2x24x128xf32, #tpu.memory_space<vmem>>, vector<2x16x128xf32>
    tpu.vector_store %arg11[%c0_19, %c8_20, %c0_21], %54 {strides = array<i32>} : memref<2x24x128xf32, #tpu.memory_space<vmem>>, vector<2x16x128xf32>,
    %c2_i32_22 = arith.constant 2 : i32
    %56 = arith.muli %c2_i32_22, %4 : i32
    %c2_i32_23 = arith.constant 2 : i32
    %57 = arith.muli %c2_i32_23, %56 : i32
    %c8_i32_24 = arith.constant 8 : i32
    %58 = arith.subi %c8_i32_24, %57 : i32
    %c0_25 = arith.constant 0 : index
    %59 = arith.index_cast %58 : i32 to index
    %c0_26 = arith.constant 0 : index
    %60 = vector.load %arg11[%c0_25, %59, %c0_26] : memref<2x24x128xf32, #tpu.memory_space<vmem>>, vector<2x16x128xf32>
    %c1_i32_27 = arith.constant 1 : i32
    %61 = arith.muli %c1_i32_27, %56 : i32
    %c8_i32_28 = arith.constant 8 : i32
    %62 = arith.subi %c8_i32_28, %61 : i32
    %c0_29 = arith.constant 0 : index
    %63 = arith.index_cast %62 : i32 to index
    %c0_30 = arith.constant 0 : index
    %64 = vector.load %arg11[%c0_29, %63, %c0_30] : memref<2x24x128xf32, #tpu.memory_space<vmem>>, vector<2x16x128xf32>
    %c0_31 = arith.constant 0 : index
    %c8_32 = arith.constant 8 : index
    %c0_33 = arith.constant 0 : index
    %65 = vector.load %arg11[%c0_31, %c8_32, %c0_33] : memref<2x24x128xf32, #tpu.memory_space<vmem>>, vector<2x16x128xf32>
    %66 = tpu.concatenate %60, %64, %65 in 2 : vector<2x16x128xf32>, vector<2x16x128xf32>, vector<2x16x128xf32> -> vector<2x16x384xf32>
    %67 = vector.shape_cast %66 : vector<2x16x384xf32> to vector<32x384xf32>
    %c0_34 = arith.constant 0 : index
    %c0_35 = arith.constant 0 : index
    %c0_36 = arith.constant 0 : index
    %68 = vector.load %arg5[%c0_34, %c0_35, %c0_36] : memref<1x384x128xf32, #tpu.memory_space<vmem>>, vector<1x384x128xf32>
    %69 = vector.shape_cast %68 : vector<1x384x128xf32> to vector<384x128xf32>
    %cst_37 = arith.constant dense<0.000000e+00> : vector<32x128xf32>
    %70 = tpu.matmul %67, %69, %cst_37 {dimension_numbers = #tpu.dot_dimension_numbers<[1], [0], [0], [1], [0, 0, 1, 1], [], []>} : vector<32x384xf32>, vector<384x128xf32>, vector<32x128xf32> -> vector<32x128xf32>
    %71 = vector.broadcast %10 : vector<1x128xf32> to vector<32x128xf32>
    %72 = arith.addf %70, %71 : vector<32x128xf32>
    %cst_38 = arith.constant dense<0.000000e+00> : vector<32xf32>
    %73 = vector.multi_reduction <add>, %72, %cst_38 [1] : vector<32x128xf32> to vector<32xf32>
    %74 = vector.shape_cast %73 : vector<32xf32> to vector<32x1xf32>
    %cst_39 = arith.constant 1.280000e+02 : f32
    %75 = vector.broadcast %cst_39 : f32 to vector<32x1xf32>
    %76 = arith.divf %74, %75 : vector<32x1xf32>
    %77 = vector.broadcast %76 : vector<32x1xf32> to vector<32x128xf32>
    %78 = arith.subf %72, %77 : vector<32x128xf32>
    %79 = arith.mulf %78, %78 : vector<32x128xf32>
    %cst_40 = arith.constant dense<0.000000e+00> : vector<32xf32>
    %80 = vector.multi_reduction <add>, %79, %cst_40 [1] : vector<32x128xf32> to vector<32xf32>
    %81 = vector.shape_cast %80 : vector<32xf32> to vector<32x1xf32>
    %cst_41 = arith.constant 1.280000e+02 : f32
    %82 = vector.broadcast %cst_41 : f32 to vector<32x1xf32>
    %83 = arith.divf %81, %82 : vector<32x1xf32>
    %84 = vector.broadcast %76 : vector<32x1xf32> to vector<32x128xf32>
    %85 = arith.subf %72, %84 : vector<32x128xf32>
    %cst_42 = arith.constant 9.99999993E-9 : f32
    %86 = vector.broadcast %cst_42 : f32 to vector<32x1xf32>
    %87 = arith.addf %83, %86 : vector<32x1xf32>
    %88 = math.rsqrt %87 : vector<32x1xf32>
    %89 = vector.broadcast %88 : vector<32x1xf32> to vector<32x128xf32>
    %90 = arith.mulf %85, %89 : vector<32x128xf32>
    %91 = vector.broadcast %11 : vector<1x128xf32> to vector<32x128xf32>
    %92 = arith.mulf %90, %91 : vector<32x128xf32>
    %93 = vector.broadcast %12 : vector<1x128xf32> to vector<32x128xf32>
    %94 = arith.addf %92, %93 : vector<32x128xf32>
    %cst_43 = arith.constant 0.000000e+00 : f32
    %95 = vector.broadcast %cst_43 : f32 to vector<32x128xf32>
    %96 = arith.maximumf %94, %95 : vector<32x128xf32>
    %c0_44 = arith.constant 0 : index
    %c8_45 = arith.constant 8 : index
    %c0_46 = arith.constant 0 : index
    %97 = vector.load %arg10[%c0_44, %c8_45, %c0_46] : memref<2x24x128xf32, #tpu.memory_space<vmem>>, vector<2x16x128xf32>
    %98 = vector.shape_cast %97 : vector<2x16x128xf32> to vector<32x128xf32>
    %99 = vector.broadcast %13 : vector<1x128xf32> to vector<32x128xf32>
    %100 = arith.mulf %99, %96 : vector<32x128xf32>
    %101 = arith.addf %100, %98 : vector<32x128xf32>
    %102 = vector.shape_cast %101 : vector<32x128xf32> to vector<2x16x128xf32>
    %c0_47 = arith.constant 0 : index
    %c8_48 = arith.constant 8 : index
    %c0_49 = arith.constant 0 : index
    %103 = vector.load %arg10[%c0_47, %c8_48, %c0_49] : memref<2x24x128xf32, #tpu.memory_space<vmem>>, vector<2x16x128xf32>
    tpu.vector_store %arg10[%c0_47, %c8_48, %c0_49], %102 {strides = array<i32>} : memref<2x24x128xf32, #tpu.memory_space<vmem>>, vector<2x16x128xf32>,
    %c1_i32_50 = arith.constant 1 : i32
    %104 = arith.cmpi eq, %arg1, %c1_i32_50 : i32
    %105 = arith.extui %104 : i1 to i32
    %c0_i32_51 = arith.constant 0 : i32
    %106 = arith.cmpi ne, %105, %c0_i32_51 : i32
    scf.if %106 {
      %c0_52 = arith.constant 0 : index
      %c0_53 = arith.constant 0 : index
      %107 = vector.load %arg7[%c0_52, %c0_53] : memref<128x128xf32, #tpu.memory_space<vmem>>, vector<128x128xf32>
      %cst_54 = arith.constant dense<0.000000e+00> : vector<32x128xf32>
      %108 = tpu.matmul %101, %107, %cst_54 {dimension_numbers = #tpu.dot_dimension_numbers<[1], [0], [0], [1], [0, 0, 1, 1], [], []>} : vector<32x128xf32>, vector<128x128xf32>, vector<32x128xf32> -> vector<32x128xf32>
      %c0_55 = arith.constant 0 : index
      %c0_56 = arith.constant 0 : index
      %109 = vector.load %arg8[%c0_55, %c0_56] : memref<1x128xf32, #tpu.memory_space<vmem>>, vector<1x128xf32>
      %110 = vector.broadcast %109 : vector<1x128xf32> to vector<32x128xf32>
      %111 = arith.addf %108, %110 : vector<32x128xf32>
      %112 = vector.shape_cast %111 : vector<32x128xf32> to vector<2x16x128xf32>
      %c0_57 = arith.constant 0 : index
      %c0_58 = arith.constant 0 : index
      %c0_59 = arith.constant 0 : index
      %c0_60 = arith.constant 0 : index
      %113 = vector.load %arg9[%c0_57, %c0_58, %c0_59, %c0_60] : memref<1x2x16x128xf32, #tpu.memory_space<vmem>>, vector<1x2x16x128xf32>
      %114 = vector.shape_cast %113 : vector<1x2x16x128xf32> to vector<2x16x128xf32>
      %115 = vector.shape_cast %112 : vector<2x16x128xf32> to vector<1x2x16x128xf32>
      tpu.vector_store %arg9[%c0_57, %c0_58, %c0_59, %c0_60], %115 {strides = array<i32>} : memref<1x2x16x128xf32, #tpu.memory_space<vmem>>, vector<1x2x16x128xf32>,
    } else {
    }
    return
  }
  func.func @transform_0(%arg0: i32, %arg1: i32, %arg2: memref<2xi32, #tpu.memory_space<smem>>) -> (i32, i32, i32, i32) {
    %c0_i32 = arith.constant 0 : i32
    %c0_i32_0 = arith.constant 0 : i32
    %c0_i32_1 = arith.constant 0 : i32
    %c0_i32_2 = arith.constant 0 : i32
    return %arg0, %c0_i32, %c0_i32_0, %c0_i32_1 : i32, i32, i32, i32
  }
  func.func @transform_1(%arg0: i32, %arg1: i32, %arg2: memref<2xi32, #tpu.memory_space<smem>>) -> (i32, i32, i32) {
    %c0_i32 = arith.constant 0 : i32
    %c0_i32_0 = arith.constant 0 : i32
    %c0_i32_1 = arith.constant 0 : i32
    return %arg1, %c0_i32, %c0_i32_0 : i32, i32, i32
  }
  func.func @transform_2(%arg0: i32, %arg1: i32, %arg2: memref<2xi32, #tpu.memory_space<smem>>) -> (i32, i32, i32) {
    %c0_i32 = arith.constant 0 : i32
    %c0_i32_0 = arith.constant 0 : i32
    %c0_i32_1 = arith.constant 0 : i32
    return %arg1, %c0_i32, %c0_i32_0 : i32, i32, i32
  }
  func.func @transform_3(%arg0: i32, %arg1: i32, %arg2: memref<2xi32, #tpu.memory_space<smem>>) -> (i32, i32, i32) {
    %c0_i32 = arith.constant 0 : i32
    %c0_i32_0 = arith.constant 0 : i32
    %c0_i32_1 = arith.constant 0 : i32
    return %arg1, %c0_i32, %c0_i32_0 : i32, i32, i32
  }
  func.func @transform_4(%arg0: i32, %arg1: i32, %arg2: memref<2xi32, #tpu.memory_space<smem>>) -> (i32, i32) {
    %c0_i32 = arith.constant 0 : i32
    %c0_i32_0 = arith.constant 0 : i32
    %c0_i32_1 = arith.constant 0 : i32
    return %c0_i32, %c0_i32_0 : i32, i32
  }
  func.func @transform_5(%arg0: i32, %arg1: i32, %arg2: memref<2xi32, #tpu.memory_space<smem>>) -> (i32, i32) {
    %c0_i32 = arith.constant 0 : i32
    %c0_i32_0 = arith.constant 0 : i32
    %c0_i32_1 = arith.constant 0 : i32
    return %c0_i32, %c0_i32_0 : i32, i32
  }
  func.func @transform_6(%arg0: i32, %arg1: i32, %arg2: memref<2xi32, #tpu.memory_space<smem>>) -> (i32, i32, i32, i32) {
    %c0_i32 = arith.constant 0 : i32
    %c0_i32_0 = arith.constant 0 : i32
    %c0_i32_1 = arith.constant 0 : i32
    %c0_i32_2 = arith.constant 0 : i32
    return %arg0, %c0_i32, %c0_i32_0, %c0_i32_1 : i32, i32, i32, i32
  }
}

</mosaic_0001>

<llo_original>
// kernel: tpu_custom_call.1
$region0: #{tpu_custom_call.1}
  #allocation0 [shape = 'u32[]', space=smem, size = 0x4, offset = 0x4, fixed_abs, tag = 'smem constant byte address 0x4 - core index']
  #allocation1 [shape = 'u32[144,128]{1,0:T(1,128)}', space=vmem, size = 0x12000, scoped, tag = 'internal scratch']
  #allocation2 [shape = 'f32[2,24,128]{2,1,0:T(8,128)}', space=vmem, size = 0x6000, scoped, tag = 'scratch operand']
  #allocation3 [shape = 'f32[2,24,128]{2,1,0:T(8,128)}', space=vmem, size = 0x6000, scoped, tag = 'scratch operand']
  #allocation4 [shape = 's32[1]{0}', space=sflag, size = 0x4, scoped, tag = 'scoped memory for tpu_custom_call.1']
  #allocation5 [shape = 'u8[512]{0}', space=smem, size = 0x200, scoped, tag = 'prefetched SMEM operand 0']
  %s0 = inlined_call_operand.hbm [shape: s32[2], index: 0, kind: input, shape index: {}]
  %s1 = inlined_call_operand.hbm [shape: f32[2,2,16,128], index: 1, kind: input, shape index: {}]
  %s2 = inlined_call_operand.hbm [shape: f32[2,384,128], index: 2, kind: input, shape index: {}]
  %s3 = inlined_call_operand.hbm [shape: f32[2,384,128], index: 3, kind: input, shape index: {}]
  %s4 = inlined_call_operand.hbm [shape: f32[2,8,128], index: 4, kind: input, shape index: {}]
  %s5 = inlined_call_operand.hbm [shape: f32[128,128], index: 5, kind: input, shape index: {}]
  %s6 = inlined_call_operand.vmem [shape: f32[1,128], index: 6, kind: input, shape index: {}]
  %s7 = inlined_call_operand.hbm [shape: f32[2,2,16,128], index: 7, kind: output, shape index: {}]
  %s8 = sld [smem:[#allocation0]]
  $region85: #{tpu_custom_call.1} parent=0
    _
  %s10 = ssub.s32 1, %s8
  %s11 = scalar_select 0, %s10, %s8
  %13 = dma.hbm_to_smem %s0, 16, [#allocation5], [#allocation4]
  %14 = dma.done [#allocation4], 16
  %15 = sfence
  $region1: #{tpu_custom_call.1} parent=0
    #allocation6 [shape = 'u8[32768]{0}', space=vmem, size = 0x8000, scoped, tag = 'input window, operand 1']
    #allocation7 [shape = 's32[2]{0}', space=sflag, size = 0x8, scoped, tag = 'scoped memory for tpu_custom_call.1']
    #allocation8 [shape = 's32[2]{0}', space=sflag, size = 0x8, scoped, tag = 'scoped memory for tpu_custom_call.1']
    #allocation9 [shape = 'u8[393216]{0}', space=vmem, size = 0x60000, scoped, tag = 'input window, operand 2']
    #allocation10 [shape = 's32[2]{0}', space=sflag, size = 0x8, scoped, tag = 'scoped memory for tpu_custom_call.1']
    #allocation11 [shape = 'u8[393216]{0}', space=vmem, size = 0x60000, scoped, tag = 'input window, operand 3']
    #allocation12 [shape = 'u8[8192]{0}', space=vmem, size = 0x2000, scoped, tag = 'input window, operand 4']
    #allocation13 [shape = 's32[2]{0}', space=sflag, size = 0x8, scoped, tag = 'scoped memory for tpu_custom_call.1']
    #allocation14 [shape = 'u8[65536]{0}', space=vmem, size = 0x10000, scoped, tag = 'input window, operand 5, single buffered']
    #allocation15 [shape = 'u8[32768]{0}', space=vmem, size = 0x8000, scoped, tag = 'output window, operand 0']
    %16 = vsyncpa [#allocation7], 0
    %s17 = scalar_lea.sflag [#allocation7], 1
    %18 = vsyncpa %s17, 0
    %19 = vsyncpa [#allocation10], 0
    %s20 = scalar_lea.sflag [#allocation10], 1
    %21 = vsyncpa %s20, 0
    %22 = vsyncpa [#allocation13], 0
    %s23 = scalar_lea.sflag [#allocation13], 1
    %24 = vsyncpa %s23, 0
    %25 = vsyncpa [#allocation8], 0
    %s26 = scalar_lea.sflag [#allocation8], 1
    %27 = vsyncpa %s26, 0
    loop: start=0, step=1, limit=6
    $region2: #{tpu_custom_call.1} parent=1 // loop_pre_header
      _
    $region3: #{tpu_custom_call.1} parent=1 // loop_header
      %s29 = sphi 0, %s33
      %p30 = scmp.ge.s32.totalorder %s29, 6
      %s36 = sphi 0, %s48
      %s37 = sphi 0, %s44
      %s38 = sphi 0, %s36
      %s39 = sphi 0, %s37
      %s40 = sphi 0, %s38
      %s41 = sphi 0, %s39
      %s51 = sphi 0, %s53
      %s54 = sphi 0, %s51
      %s55 = sphi 0, %s54
      %s71 = sphi 0, %s55
      %s77 = sphi 0, %s79
      %s80 = sphi 0, %s77
      %s81 = sphi 0, %s80
      %s97 = sphi 0, %s81
      %s103 = sphi 0, %s105
      %s106 = sphi 0, %s103
      %s107 = sphi 0, %s106
      %s123 = sphi 0, %s107
      %s129 = sphi 0, %s131
      %s132 = sphi 0, %s129
      %s133 = sphi 0, %s132
      %s149 = sphi 0, %s133
      %s153 = sphi 0, %s153
      %s155 = sphi 0, %s153
      %s156 = sphi 0, %s155
      %s170 = sphi 0, %s156
      %s174 = sphi 0, %s174
      %s176 = sphi 0, %s174
      %s177 = sphi 0, %s176
      %s191 = sphi 0, %s177
      %s197 = sphi 0, %s199
      %s200 = sphi 0, %s197
      %s201 = sphi 0, %s200
      %s217 = sphi 0, %s201
    $region4: #{tpu_custom_call.1} parent=1 // loop_header_branch
      %32 = sbr.rel (%p30) target = $region8
    $region5: #{tpu_custom_call.1} parent=1 // loop_body
      %s34 = ssub.s32 %s29, 1
      %s35 = ssub.s32 %s29, 2
      %s42 = sadd.s32 1, %s37
      %p43 = scmp.ge.s32.totalorder %s42, 2
      %s44 = scalar_select %p43, 0, %s42
      %s45 = sadd.s32 1, %s36
      %s46 = scalar_select %p43, %s45, %s36
      %p47 = scmp.ge.s32.totalorder %s46, 2
      %s48 = scalar_select %p47, 0, %s46
      %s49 = ssub.s32 %s36, %s48
      %p50 = scmp.eq.s32.totalorder %s49, 0
      %s52 = sadd.s32 %s51, 1
      %s53 = scalar_select %p50, %s51, %s52
      %p56 = pneg %p50
      %p57 = scmp.eq.s32.totalorder %s29, 3
      %p58 = por %p56, %p57
      %p59 = scmp.ne.s32.totalorder %s51, %s54
      %p60 = scmp.eq.s32.totalorder %s29, 0
      %p61 = por %p59, %p60
      %p62 = scmp.ne.s32.totalorder %s51, %s54
      %p63 = scmp.eq.s32.totalorder %s34, 3
      %p64 = por %p62, %p63
      %p65 = scmp.ne.s32.totalorder %s54, %s55
      %p66 = scmp.eq.s32.totalorder %s34, 0
      %p67 = por %p65, %p66
      %p68 = scmp.ne.s32.totalorder %s54, %s55
      %p69 = scmp.eq.s32.totalorder %s35, 3
      %p70 = por %p68, %p69
      %p72 = scmp.ne.s32.totalorder %s55, %s71
      %p73 = scmp.eq.s32.totalorder %s35, 0
      %p74 = por %p72, %p73
      %s75 = ssub.s32 %s37, %s44
      %p76 = scmp.eq.s32.totalorder %s75, 0
      %s78 = sadd.s32 %s77, 1
      %s79 = scalar_select %p76, %s77, %s78
      %p82 = pneg %p76
      %p83 = scmp.eq.s32.totalorder %s29, 3
      %p84 = por %p82, %p83
      %p85 = scmp.ne.s32.totalorder %s77, %s80
      %p86 = scmp.eq.s32.totalorder %s29, 0
      %p87 = por %p85, %p86
      %p88 = scmp.ne.s32.totalorder %s77, %s80
      %p89 = scmp.eq.s32.totalorder %s34, 3
      %p90 = por %p88, %p89
      %p91 = scmp.ne.s32.totalorder %s80, %s81
      %p92 = scmp.eq.s32.totalorder %s34, 0
      %p93 = por %p91, %p92
      %p94 = scmp.ne.s32.totalorder %s80, %s81
      %p95 = scmp.eq.s32.totalorder %s35, 3
      %p96 = por %p94, %p95
      %p98 = scmp.ne.s32.totalorder %s81, %s97
      %p99 = scmp.eq.s32.totalorder %s35, 0
      %p100 = por %p98, %p99
      %s101 = ssub.s32 %s37, %s44
      %p102 = scmp.eq.s32.totalorder %s101, 0
      %s104 = sadd.s32 %s103, 1
      %s105 = scalar_select %p102, %s103, %s104
      %p108 = pneg %p102
      %p109 = scmp.eq.s32.totalorder %s29, 3
      %p110 = por %p108, %p109
      %p111 = scmp.ne.s32.totalorder %s103, %s106
      %p112 = scmp.eq.s32.totalorder %s29, 0
      %p113 = por %p111, %p112
      %p114 = scmp.ne.s32.totalorder %s103, %s106
      %p115 = scmp.eq.s32.totalorder %s34, 3
      %p116 = por %p114, %p115
      %p117 = scmp.ne.s32.totalorder %s106, %s107
      %p118 = scmp.eq.s32.totalorder %s34, 0
      %p119 = por %p117, %p118
      %p120 = scmp.ne.s32.totalorder %s106, %s107
      %p121 = scmp.eq.s32.totalorder %s35, 3
      %p122 = por %p120, %p121
      %p124 = scmp.ne.s32.totalorder %s107, %s123
      %p125 = scmp.eq.s32.totalorder %s35, 0
      %p126 = por %p124, %p125
      %s127 = ssub.s32 %s37, %s44
      %p128 = scmp.eq.s32.totalorder %s127, 0
      %s130 = sadd.s32 %s129, 1
      %s131 = scalar_select %p128, %s129, %s130
      %p134 = pneg %p128
      %p135 = scmp.eq.s32.totalorder %s29, 3
      %p136 = por %p134, %p135
      %p137 = scmp.ne.s32.totalorder %s129, %s132
      %p138 = scmp.eq.s32.totalorder %s29, 0
      %p139 = por %p137, %p138
      %p140 = scmp.ne.s32.totalorder %s129, %s132
      %p141 = scmp.eq.s32.totalorder %s34, 3
      %p142 = por %p140, %p141
      %p143 = scmp.ne.s32.totalorder %s132, %s133
      %p144 = scmp.eq.s32.totalorder %s34, 0
      %p145 = por %p143, %p144
      %p146 = scmp.ne.s32.totalorder %s132, %s133
      %p147 = scmp.eq.s32.totalorder %s35, 3
      %p148 = por %p146, %p147
      %p150 = scmp.ne.s32.totalorder %s133, %s149
      %p151 = scmp.eq.s32.totalorder %s35, 0
      %p152 = por %p150, %p151
      %s154 = sadd.s32 %s153, 1
      %p157 = scmp.eq.s32.totalorder %s29, 3
      %p158 = scmp.ne.s32.totalorder %s153, %s155
      %p159 = scmp.eq.s32.totalorder %s29, 0
      %p160 = por %p158, %p159
      %p161 = scmp.ne.s32.totalorder %s153, %s155
      %p162 = scmp.eq.s32.totalorder %s34, 3
      %p163 = por %p161, %p162
      %p164 = scmp.ne.s32.totalorder %s155, %s156
      %p165 = scmp.eq.s32.totalorder %s34, 0
      %p166 = por %p164, %p165
      %p167 = scmp.ne.s32.totalorder %s155, %s156
      %p168 = scmp.eq.s32.totalorder %s35, 3
      %p169 = por %p167, %p168
      %p171 = scmp.ne.s32.totalorder %s156, %s170
      %p172 = scmp.eq.s32.totalorder %s35, 0
      %p173 = por %p171, %p172
      %s175 = sadd.s32 %s174, 1
      %p178 = scmp.eq.s32.totalorder %s29, 3
      %p179 = scmp.ne.s32.totalorder %s174, %s176
      %p180 = scmp.eq.s32.totalorder %s29, 0
      %p181 = por %p179, %p180
      %p182 = scmp.ne.s32.totalorder %s174, %s176
      %p183 = scmp.eq.s32.totalorder %s34, 3
      %p184 = por %p182, %p183
      %p185 = scmp.ne.s32.totalorder %s176, %s177
      %p186 = scmp.eq.s32.totalorder %s34, 0
      %p187 = por %p185, %p186
      %p188 = scmp.ne.s32.totalorder %s176, %s177
      %p189 = scmp.eq.s32.totalorder %s35, 3
      %p190 = por %p188, %p189
      %p192 = scmp.ne.s32.totalorder %s177, %s191
      %p193 = scmp.eq.s32.totalorder %s35, 0
      %p194 = por %p192, %p193
      %s195 = ssub.s32 %s36, %s48
      %p196 = scmp.eq.s32.totalorder %s195, 0
      %s198 = sadd.s32 %s197, 1
      %s199 = scalar_select %p196, %s197, %s198
      %p202 = pneg %p196
      %p203 = scmp.eq.s32.totalorder %s29, 3
      %p204 = por %p202, %p203
      %p205 = scmp.ne.s32.totalorder %s197, %s200
      %p206 = scmp.eq.s32.totalorder %s29, 0
      %p207 = por %p205, %p206
      %p208 = scmp.ne.s32.totalorder %s197, %s200
      %p209 = scmp.eq.s32.totalorder %s34, 3
      %p210 = por %p208, %p209
      %p211 = scmp.ne.s32.totalorder %s200, %s201
      %p212 = scmp.eq.s32.totalorder %s34, 0
      %p213 = por %p211, %p212
      %p214 = scmp.ne.s32.totalorder %s200, %s201
      %p215 = scmp.eq.s32.totalorder %s35, 3
      %p216 = por %p214, %p215
      %p218 = scmp.ne.s32.totalorder %s201, %s217
      %p219 = scmp.eq.s32.totalorder %s35, 0
      %p220 = por %p218, %p219
      %p221 = scmp.le.s32.totalorder 1, %s29
      %p222 = scmp.lt.s32.totalorder %s29, 5
      %p223 = pnand %p221, %p222
      %p224 = pneg %p223
      // Predicated region
      $region9: #{tpu_custom_call.1} parent=5 // pred_check
        _
      $region10: #{tpu_custom_call.1} parent=5 // pred_check_branch
        %226 = sbr.rel (%p223) target = $region12
      $region11: #{tpu_custom_call.1} parent=5 // pred_region
        %s227 = ssub.s32 %s29, 1
        // Predicated region
        $region13: #{tpu_custom_call.1} parent=11 // pred_check
          %p228 = pneg %p166
        $region14: #{tpu_custom_call.1} parent=11 // pred_check_branch
          %230 = sbr.rel (%p228) target = $region16
        $region15: #{tpu_custom_call.1} parent=11 // pred_region
          %s232 = ssub.s32 2048, 2048
          %233 = vsyncadd [#allocation13], %s232
          %s234 = sshll.u32 [#allocation14], 4
          %s235 = int_to_ptr.vmem [resolvable:$true] %s234
          %240 = dma.hbm_to_vmem [thread:$0]  %s5, 2048, %s235, [#allocation13], 128, 128, 8
        $region16: #{tpu_custom_call.1} parent=11 // pred_fallthru
          _
        // Predicated region
        $region17: #{tpu_custom_call.1} parent=11 // pred_check
          %p241 = pneg %p187
        $region18: #{tpu_custom_call.1} parent=11 // pred_check_branch
          %243 = sbr.rel (%p241) target = $region20
        $region19: #{tpu_custom_call.1} parent=11 // pred_region
          _
        $region20: #{tpu_custom_call.1} parent=11 // pred_fallthru
          _
      $region12: #{tpu_custom_call.1} parent=5 // pred_fallthru
        _
      %p244 = scmp.lt.s32.totalorder %s29, 4
      // Predicated region
      $region21: #{tpu_custom_call.1} parent=5 // pred_check
        %p245 = pneg %p244
      $region22: #{tpu_custom_call.1} parent=5 // pred_check_branch
        %247 = sbr.rel (%p245) target = $region24
      $region23: #{tpu_custom_call.1} parent=5 // pred_region
        // Predicated region
        $region25: #{tpu_custom_call.1} parent=23 // pred_check
          %p248 = pneg %p61
        $region26: #{tpu_custom_call.1} parent=23 // pred_check_branch
          %250 = sbr.rel (%p248) target = $region28
        $region27: #{tpu_custom_call.1} parent=23 // pred_region
          %s251 = sand.u32 %s51, 1
          %s252 = scalar_lea.sflag [#allocation7], %s251
          %s253 = sand.u32 %s51, 1
          %s254 = smul.addr %s253, 32
          %s255 = scalar_lea.vmem [#allocation6], %s254
          %s257 = ssub.s32 512, 512
          %258 = vsyncadd %s252, %s257
          %s259 = smul.addr %s36, 4
          %s260 = smul.addr %s259, 128
          %s261 = scalar_lea.hbm %s1, %s260
          %s262 = sshll.u32 %s255, 4
          %s263 = int_to_ptr.vmem [resolvable:$true] %s262
          %268 = dma.hbm_to_vmem [thread:$0]  %s261, 512, %s263, %s252, 128, 128, 8
        $region28: #{tpu_custom_call.1} parent=23 // pred_fallthru
          _
        // Predicated region
        $region29: #{tpu_custom_call.1} parent=23 // pred_check
          %p269 = pneg %p87
        $region30: #{tpu_custom_call.1} parent=23 // pred_check_branch
          %271 = sbr.rel (%p269) target = $region32
        $region31: #{tpu_custom_call.1} parent=23 // pred_region
          %s272 = sand.u32 %s29, 1
          %s273 = scalar_lea.sflag [#allocation10], %s272
          %s274 = sand.u32 %s77, 1
          %s275 = smul.addr %s274, 384
          %s276 = scalar_lea.vmem [#allocation9], %s275
          %s278 = ssub.s32 6144, 6144
          %279 = vsyncadd %s273, %s278
          %s280 = smul.addr %s37, 48
          %s281 = smul.addr %s280, 128
          %s282 = scalar_lea.hbm %s2, %s281
          %s283 = sshll.u32 %s276, 4
          %s284 = int_to_ptr.vmem [resolvable:$true] %s283
          %289 = dma.hbm_to_vmem [thread:$0]  %s282, 6144, %s284, %s273, 128, 128, 8
        $region32: #{tpu_custom_call.1} parent=23 // pred_fallthru
          _
        // Predicated region
        $region33: #{tpu_custom_call.1} parent=23 // pred_check
          %p290 = pneg %p113
        $region34: #{tpu_custom_call.1} parent=23 // pred_check_branch
          %292 = sbr.rel (%p290) target = $region36
        $region35: #{tpu_custom_call.1} parent=23 // pred_region
          %s293 = sand.u32 %s29, 1
          %s294 = scalar_lea.sflag [#allocation10], %s293
          %s295 = sand.u32 %s103, 1
          %s296 = smul.addr %s295, 384
          %s297 = scalar_lea.vmem [#allocation11], %s296
          %s299 = ssub.s32 6144, 6144
          %300 = vsyncadd %s294, %s299
          %s301 = smul.addr %s37, 48
          %s302 = smul.addr %s301, 128
          %s303 = scalar_lea.hbm %s3, %s302
          %s304 = sshll.u32 %s297, 4
          %s305 = int_to_ptr.vmem [resolvable:$true] %s304
          %310 = dma.hbm_to_vmem [thread:$0]  %s303, 6144, %s305, %s294, 128, 128, 8
        $region36: #{tpu_custom_call.1} parent=23 // pred_fallthru
          _
        // Predicated region
        $region37: #{tpu_custom_call.1} parent=23 // pred_check
          %p311 = pneg %p139
        $region38: #{tpu_custom_call.1} parent=23 // pred_check_branch
          %313 = sbr.rel (%p311) target = $region40
        $region39: #{tpu_custom_call.1} parent=23 // pred_region
          %s314 = sand.u32 %s29, 1
          %s315 = scalar_lea.sflag [#allocation13], %s314
          %s316 = sand.u32 %s129, 1
          %s317 = smul.addr %s316, 8
          %s318 = scalar_lea.vmem [#allocation12], %s317
          %s320 = ssub.s32 128, 128
          %321 = vsyncadd %s315, %s320
          %s322 = smul.addr %s37, 128
          %s323 = scalar_lea.hbm %s4, %s322
          %s325 = sshll.u32 %s318, 4
          %s326 = int_to_ptr.vmem [resolvable:$true] %s325
          %328 = dma.hbm_to_vmem [thread:$0]  %s323, 128, %s326, %s315
        $region40: #{tpu_custom_call.1} parent=23 // pred_fallthru
          _
      $region24: #{tpu_custom_call.1} parent=5 // pred_fallthru
        _
      %p329 = scmp.le.s32.totalorder 1, %s29
      %p330 = scmp.lt.s32.totalorder %s29, 5
      %p331 = pnand %p329, %p330
      %p332 = pneg %p331
      // Predicated region
      $region41: #{tpu_custom_call.1} parent=5 // pred_check
        _
      $region42: #{tpu_custom_call.1} parent=5 // pred_check_branch
        %334 = sbr.rel (%p331) target = $region44
      $region43: #{tpu_custom_call.1} parent=5 // pred_region
        %s335 = ssub.s32 %s29, 1
        %s336 = sand.u32 %s54, 1
        %s337 = scalar_lea.sflag [#allocation7], %s336
        %s338 = sand.u32 %s54, 1
        %s339 = smul.addr %s338, 32
        %s340 = scalar_lea.vmem [#allocation6], %s339
        // Predicated region
        $region45: #{tpu_custom_call.1} parent=43 // pred_check
          %p341 = pneg %p67
        $region46: #{tpu_custom_call.1} parent=43 // pred_check_branch
          %343 = sbr.rel (%p341) target = $region48
        $region47: #{tpu_custom_call.1} parent=43 // pred_region
          %344 = dma.done %s337, 512
        $region48: #{tpu_custom_call.1} parent=43 // pred_fallthru
          _
        %s345 = sand.u32 %s34, 1
        %s346 = scalar_lea.sflag [#allocation10], %s345
        %s347 = sand.u32 %s80, 1
        %s348 = smul.addr %s347, 384
        %s349 = scalar_lea.vmem [#allocation9], %s348
        // Predicated region
        $region49: #{tpu_custom_call.1} parent=43 // pred_check
          %p350 = pneg %p93
        $region50: #{tpu_custom_call.1} parent=43 // pred_check_branch
          %352 = sbr.rel (%p350) target = $region52
        $region51: #{tpu_custom_call.1} parent=43 // pred_region
          %353 = dma.done %s346, 6144
        $region52: #{tpu_custom_call.1} parent=43 // pred_fallthru
          _
        %s354 = sand.u32 %s34, 1
        %s355 = scalar_lea.sflag [#allocation10], %s354
        %s356 = sand.u32 %s106, 1
        %s357 = smul.addr %s356, 384
        %s358 = scalar_lea.vmem [#allocation11], %s357
        // Predicated region
        $region53: #{tpu_custom_call.1} parent=43 // pred_check
          %p359 = pneg %p119
        $region54: #{tpu_custom_call.1} parent=43 // pred_check_branch
          %361 = sbr.rel (%p359) target = $region56
        $region55: #{tpu_custom_call.1} parent=43 // pred_region
          %362 = dma.done %s355, 6144
        $region56: #{tpu_custom_call.1} parent=43 // pred_fallthru
          _
        %s363 = sand.u32 %s34, 1
        %s364 = scalar_lea.sflag [#allocation13], %s363
        %s365 = sand.u32 %s132, 1
        %s366 = smul.addr %s365, 8
        %s367 = scalar_lea.vmem [#allocation12], %s366
        // Predicated region
        $region57: #{tpu_custom_call.1} parent=43 // pred_check
          %p368 = pneg %p145
        $region58: #{tpu_custom_call.1} parent=43 // pred_check_branch
          %370 = sbr.rel (%p368) target = $region60
        $region59: #{tpu_custom_call.1} parent=43 // pred_region
          %371 = dma.done %s364, 128
        $region60: #{tpu_custom_call.1} parent=43 // pred_fallthru
          _
        // Predicated region
        $region61: #{tpu_custom_call.1} parent=43 // pred_check
          %p372 = pneg %p166
        $region62: #{tpu_custom_call.1} parent=43 // pred_check_branch
          %374 = sbr.rel (%p372) target = $region64
        $region63: #{tpu_custom_call.1} parent=43 // pred_region
          %375 = dma.done [#allocation13], 2048
        $region64: #{tpu_custom_call.1} parent=43 // pred_fallthru
          _
        %s376 = sand.u32 %s54, 1
        %s377 = scalar_lea.sflag [#allocation7], %s376
        %s378 = sand.u32 %s54, 1
        %s379 = smul.addr %s378, 32
        %s380 = scalar_lea.vmem [#allocation6], %s379
        %p381 = pneg %p67
        %p382 = pneg %p64
        %s383 = sand.u32 %s34, 1
        %s384 = scalar_lea.sflag [#allocation10], %s383
        %s385 = sand.u32 %s80, 1
        %s386 = smul.addr %s385, 384
        %s387 = scalar_lea.vmem [#allocation9], %s386
        %p388 = pneg %p93
        %p389 = pneg %p90
        %s390 = sand.u32 %s34, 1
        %s391 = scalar_lea.sflag [#allocation10], %s390
        %s392 = sand.u32 %s106, 1
        %s393 = smul.addr %s392, 384
        %s394 = scalar_lea.vmem [#allocation11], %s393
        %p395 = pneg %p119
        %p396 = pneg %p116
        %s397 = sand.u32 %s34, 1
        %s398 = scalar_lea.sflag [#allocation13], %s397
        %s399 = sand.u32 %s132, 1
        %s400 = smul.addr %s399, 8
        %s401 = scalar_lea.vmem [#allocation12], %s400
        %p402 = pneg %p145
        %p403 = pneg %p142
        %p404 = pneg %p166
        %p405 = pneg %p163
        %p406 = pneg %p187
        %p407 = pneg %p184
        %p408 = pneg %p213
        %p409 = pneg %p210
        %s410 = sand.u32 %s200, 1
        %s411 = scalar_lea.sflag [#allocation8], %s410
        %s412 = sand.u32 %s200, 1
        %s413 = smul.addr %s412, 32
        %s414 = scalar_lea.vmem [#allocation15], %s413
        %p415 = scmp.eq.s32.totalorder %s39, 0
        // Predicated region
        $region65: #{tpu_custom_call.1} parent=43 // pred_check
          %p416 = pneg %p415
        $region66: #{tpu_custom_call.1} parent=43 // pred_check_branch
          %418 = sbr.rel (%p416) target = $region68
        $region67: #{tpu_custom_call.1} parent=43 // pred_region
          %419 = vst [vmem:[#allocation2] sm:$0xff] 0.0
          %420 = vst [vmem:[#allocation2 + $0x18] sm:$0xff] 0.0
          %421 = vst [vmem:[#allocation3] sm:$0xff] 0.0
          %422 = vst [vmem:[#allocation3 + $0x18] sm:$0xff] 0.0
          %v423 = vld [vmem:[%s340] sm:$0xff]
          %v424 = vld [vmem:[%s340 + $0x8] sm:$0xff]
          %v425 = vld [vmem:[%s340 + $0x10] sm:$0xff]
          %v426 = vld [vmem:[%s340 + $0x18] sm:$0xff]
          %427 = vst [vmem:[#allocation2 + $0x8] sm:$0xff] %v423
          %428 = vst [vmem:[#allocation2 + $0x10] sm:$0xff] %v424
          %429 = vst [vmem:[#allocation2 + $0x20] sm:$0xff] %v425
          %430 = vst [vmem:[#allocation2 + $0x28] sm:$0xff] %v426
        $region68: #{tpu_custom_call.1} parent=43 // pred_fallthru
          _
        %s431 = sld [smem:[#allocation5 + %s39]]
        %v432 = vld [vmem:[%s367] sm:$0xff]
        %s433 = smul.u32 %s431, 2
        %s434 = ssub.s32 8, %s433
        %s435 = scalar_lea.vmem [#allocation2], %s434
        %v436 = vld [vmem:[%s435] sm:$0xff]
        %v437 = vld [vmem:[%s435 + $0x8] sm:$0xff]
        %v438 = vld [vmem:[%s435 + $0x18] sm:$0xff]
        %v439 = vld [vmem:[%s435 + $0x20] sm:$0xff]
        %s440 = ssub.s32 8, %s431
        %s441 = scalar_lea.vmem [#allocation2], %s440
        %v442 = vld [vmem:[%s441] sm:$0xff]
        %v443 = vld [vmem:[%s441 + $0x8] sm:$0xff]
        %v444 = vld [vmem:[%s441 + $0x18] sm:$0xff]
        %v445 = vld [vmem:[%s441 + $0x20] sm:$0xff]
        %v446 = vld [vmem:[#allocation2 + $0x8] sm:$0xff]
        %v447 = vld [vmem:[#allocation2 + $0x10] sm:$0xff]
        %v448 = vld [vmem:[#allocation2 + $0x20] sm:$0xff]
        %v449 = vld [vmem:[#allocation2 + $0x28] sm:$0xff]
        %v450 = vld [vmem:[%s349] sm:$0xff]
        %v451 = vld [vmem:[%s349 + $0x8] sm:$0xff]
        %v452 = vld [vmem:[%s349 + $0x10] sm:$0xff]
        %v453 = vld [vmem:[%s349 + $0x18] sm:$0xff]
        %v454 = vld [vmem:[%s349 + $0x20] sm:$0xff]
        %v455 = vld [vmem:[%s349 + $0x28] sm:$0xff]
        %v456 = vld [vmem:[%s349 + $0x30] sm:$0xff]
        %v457 = vld [vmem:[%s349 + $0x38] sm:$0xff]
        %v458 = vld [vmem:[%s349 + $0x40] sm:$0xff]
        %v459 = vld [vmem:[%s349 + $0x48] sm:$0xff]
        %v460 = vld [vmem:[%s349 + $0x50] sm:$0xff]
        %v461 = vld [vmem:[%s349 + $0x58] sm:$0xff]
        %v462 = vld [vmem:[%s349 + $0x60] sm:$0xff]
        %v463 = vld [vmem:[%s349 + $0x68] sm:$0xff]
        %v464 = vld [vmem:[%s349 + $0x70] sm:$0xff]
        %v465 = vld [vmem:[%s349 + $0x78] sm:$0xff]
        %v466 = vld [vmem:[%s349 + $0x80] sm:$0xff]
        %v467 = vld [vmem:[%s349 + $0x88] sm:$0xff]
        %v468 = vld [vmem:[%s349 + $0x90] sm:$0xff]
        %v469 = vld [vmem:[%s349 + $0x98] sm:$0xff]
        %v470 = vld [vmem:[%s349 + $0xa0] sm:$0xff]
        %v471 = vld [vmem:[%s349 + $0xa8] sm:$0xff]
        %v472 = vld [vmem:[%s349 + $0xb0] sm:$0xff]
        %v473 = vld [vmem:[%s349 + $0xb8] sm:$0xff]
        %v474 = vld [vmem:[%s349 + $0xc0] sm:$0xff]
        %v475 = vld [vmem:[%s349 + $0xc8] sm:$0xff]
        %v476 = vld [vmem:[%s349 + $0xd0] sm:$0xff]
        %v477 = vld [vmem:[%s349 + $0xd8] sm:$0xff]
        %v478 = vld [vmem:[%s349 + $0xe0] sm:$0xff]
        %v479 = vld [vmem:[%s349 + $0xe8] sm:$0xff]
        %v480 = vld [vmem:[%s349 + $0xf0] sm:$0xff]
        %v481 = vld [vmem:[%s349 + $0xf8] sm:$0xff]
        %v482 = vld [vmem:[%s349 + $0x100] sm:$0xff]
        %v483 = vld [vmem:[%s349 + $0x108] sm:$0xff]
        %v484 = vld [vmem:[%s349 + $0x110] sm:$0xff]
        %v485 = vld [vmem:[%s349 + $0x118] sm:$0xff]
        %v486 = vld [vmem:[%s349 + $0x120] sm:$0xff]
        %v487 = vld [vmem:[%s349 + $0x128] sm:$0xff]
        %v488 = vld [vmem:[%s349 + $0x130] sm:$0xff]
        %v489 = vld [vmem:[%s349 + $0x138] sm:$0xff]
        %v490 = vld [vmem:[%s349 + $0x140] sm:$0xff]
        %v491 = vld [vmem:[%s349 + $0x148] sm:$0xff]
        %v492 = vld [vmem:[%s349 + $0x150] sm:$0xff]
        %v493 = vld [vmem:[%s349 + $0x158] sm:$0xff]
        %v494 = vld [vmem:[%s349 + $0x160] sm:$0xff]
        %v495 = vld [vmem:[%s349 + $0x168] sm:$0xff]
        %v496 = vld [vmem:[%s349 + $0x170] sm:$0xff]
        %v497 = vld [vmem:[%s349 + $0x178] sm:$0xff]
        %v498 = vlaneseq
        %v499 = vshrl.u32 %v498, 7
        %v500 = vsub.s32 0, %v499
        %v501 = vrot.slane %v432, %v500
        %502 = vmatprep.subr.mxu0 0.0
        %503 = vmatpush1.msra.mxu0 %v450
        %504 = vmatprep.subr.mxu0 0.0
        %505 = vmatpush1.msra.mxu0 %v451
        %506 = vmatprep.subr.mxu0 0.0
        %507 = vmatpush1.msra.mxu0 %v452
        %508 = vmatprep.subr.mxu0 0.0
        %509 = vmatpush1.msra.mxu0 %v453
        %510 = vmatprep.subr.mxu0 0.0
        %511 = vmatpush1.msra.mxu0 %v454
        %512 = vmatprep.subr.mxu0 0.0
        %513 = vmatpush1.msra.mxu0 %v455
        %514 = vmatprep.subr.mxu0 0.0
        %515 = vmatpush1.msra.mxu0 %v456
        %516 = vmatprep.subr.mxu0 0.0
        %517 = vmatpush1.msra.mxu0 %v457
        %518 = vmatprep.subr.mxu0 0.0
        %519 = vmatpush1.msra.mxu0 %v458
        %520 = vmatprep.subr.mxu0 0.0
        %521 = vmatpush1.msra.mxu0 %v459
        %522 = vmatprep.subr.mxu0 0.0
        %523 = vmatpush1.msra.mxu0 %v460
        %524 = vmatprep.subr.mxu0 0.0
        %525 = vmatpush1.msra.mxu0 %v461
        %526 = vmatprep.subr.mxu0 0.0
        %527 = vmatpush1.msra.mxu0 %v462
        %528 = vmatprep.subr.mxu0 0.0
        %529 = vmatpush1.msra.mxu0 %v463
        %530 = vmatprep.subr.mxu0 0.0
        %531 = vmatpush1.msra.mxu0 %v464
        %532 = vmatprep.subr.mxu0 0.0
        %533 = vmatpush1.msra.mxu0 %v465
        %534 = vmatprep.subr.mxu0 0.0
        %535 = vmatpush1.msra.mxu0 %v466
        %536 = vmatprep.subr.mxu0 0.0
        %537 = vmatpush1.msra.mxu0 %v467
        %538 = vmatprep.subr.mxu0 0.0
        %539 = vmatpush1.msra.mxu0 %v468
        %540 = vmatprep.subr.mxu0 0.0
        %541 = vmatpush1.msra.mxu0 %v469
        %542 = vmatprep.subr.mxu0 0.0
        %543 = vmatpush1.msra.mxu0 %v470
        %544 = vmatprep.subr.mxu0 0.0
        %545 = vmatpush1.msra.mxu0 %v471
        %546 = vmatprep.subr.mxu0 0.0
        %547 = vmatpush1.msra.mxu0 %v472
        %548 = vmatprep.subr.mxu0 0.0
        %549 = vmatpush1.msra.mxu0 %v473
        %550 = vmatprep.subr.mxu0 0.0
        %551 = vmatpush1.msra.mxu0 %v474
        %552 = vmatprep.subr.mxu0 0.0
        %553 = vmatpush1.msra.mxu0 %v475
        %554 = vmatprep.subr.mxu0 0.0
        %555 = vmatpush1.msra.mxu0 %v476
        %556 = vmatprep.subr.mxu0 0.0
        %557 = vmatpush1.msra.mxu0 %v477
        %558 = vmatprep.subr.mxu0 0.0
        %559 = vmatpush1.msra.mxu0 %v478
        %560 = vmatprep.subr.mxu0 0.0
        %561 = vmatpush1.msra.mxu0 %v479
        %562 = vmatprep.subr.mxu0 0.0
        %563 = vmatpush1.msra.mxu0 %v480
        %564 = vmatprep.subr.mxu0 0.0
        %565 = vmatpush1.msra.mxu0 %v481
        %566 = vmatprep.mubr.f32.mxu0 %v442
        %567 = vmatmul.mubr.f32.gmra.mrb[0].mxu0 %v436
        %v568 = vpop.f32.mrb[0].mxu0
        %v569 = vadd.f32 %v501, %v568
        %v570 = vpop.f32.mrb[0].mxu0
        %571 = vmatprep.mubr.f32.mxu0 %v443
        %572 = vmatmul.mubr.f32.gmra.mrb[0].mxu0 %v437
        %v573 = vpop.f32.mrb[0].mxu0
        %v574 = vadd.f32 %v501, %v573
        %v575 = vpop.f32.mrb[0].mxu0
        %576 = vmatprep.mubr.f32.mxu0 %v444
        %577 = vmatmul.mubr.f32.gmra.mrb[0].mxu0 %v438
        %v578 = vpop.f32.mrb[0].mxu0
        %v579 = vadd.f32 %v501, %v578
        %v580 = vpop.f32.mrb[0].mxu0
        %581 = vmatprep.mubr.f32.mxu0 %v445
        %582 = vmatmul.mubr.f32.gmra.mrb[0].mxu0 %v439
        %v583 = vpop.f32.mrb[0].mxu0
        %v584 = vadd.f32 %v501, %v583
        %v585 = vpop.f32.mrb[0].mxu0
        %586 = vdwg.mxu0
        %587 = vmatprep.subr.mxu0 0.0
        %588 = vmatpush1.msra.mxu0 %v482
        %589 = vmatprep.subr.mxu0 0.0
        %590 = vmatpush1.msra.mxu0 %v483
        %591 = vmatprep.subr.mxu0 0.0
        %592 = vmatpush1.msra.mxu0 %v484
        %593 = vmatprep.subr.mxu0 0.0
        %594 = vmatpush1.msra.mxu0 %v485
        %595 = vmatprep.subr.mxu0 0.0
        %596 = vmatpush1.msra.mxu0 %v486
        %597 = vmatprep.subr.mxu0 0.0
        %598 = vmatpush1.msra.mxu0 %v487
        %599 = vmatprep.subr.mxu0 0.0
        %600 = vmatpush1.msra.mxu0 %v488
        %601 = vmatprep.subr.mxu0 0.0
        %602 = vmatpush1.msra.mxu0 %v489
        %603 = vmatprep.subr.mxu0 0.0
        %604 = vmatpush1.msra.mxu0 %v490
        %605 = vmatprep.subr.mxu0 0.0
        %606 = vmatpush1.msra.mxu0 %v491
        %607 = vmatprep.subr.mxu0 0.0
        %608 = vmatpush1.msra.mxu0 %v492
        %609 = vmatprep.subr.mxu0 0.0
        %610 = vmatpush1.msra.mxu0 %v493
        %611 = vmatprep.subr.mxu0 0.0
        %612 = vmatpush1.msra.mxu0 %v494
        %613 = vmatprep.subr.mxu0 0.0
        %614 = vmatpush1.msra.mxu0 %v495
        %615 = vmatprep.subr.mxu0 0.0
        %616 = vmatpush1.msra.mxu0 %v496
        %617 = vmatprep.subr.mxu0 0.0
        %618 = vmatpush1.msra.mxu0 %v497
        %619 = vmatprep.subr.mxu0 0.0
        %620 = vmatpush1.msra.mxu0 0.0
        %621 = vmatprep.subr.mxu0 0.0
        %622 = vmatpush1.msra.mxu0 0.0
        %623 = vmatprep.subr.mxu0 0.0
        %624 = vmatpush1.msra.mxu0 0.0
        %625 = vmatprep.subr.mxu0 0.0
        %626 = vmatpush1.msra.mxu0 0.0
        %627 = vmatprep.subr.mxu0 0.0
        %628 = vmatpush1.msra.mxu0 0.0
        %629 = vmatprep.subr.mxu0 0.0
        %630 = vmatpush1.msra.mxu0 0.0
        %631 = vmatprep.subr.mxu0 0.0
        %632 = vmatpush1.msra.mxu0 0.0
        %633 = vmatprep.subr.mxu0 0.0
        %634 = vmatpush1.msra.mxu0 0.0
        %635 = vmatprep.subr.mxu0 0.0
        %636 = vmatpush1.msra.mxu0 0.0
        %637 = vmatprep.subr.mxu0 0.0
        %638 = vmatpush1.msra.mxu0 0.0
        %639 = vmatprep.subr.mxu0 0.0
        %640 = vmatpush1.msra.mxu0 0.0
        %641 = vmatprep.subr.mxu0 0.0
        %642 = vmatpush1.msra.mxu0 0.0
        %643 = vmatprep.subr.mxu0 0.0
        %644 = vmatpush1.msra.mxu0 0.0
        %645 = vmatprep.subr.mxu0 0.0
        %646 = vmatpush1.msra.mxu0 0.0
        %647 = vmatprep.subr.mxu0 0.0
        %648 = vmatpush1.msra.mxu0 0.0
        %649 = vmatprep.subr.mxu0 0.0
        %650 = vmatpush1.msra.mxu0 0.0
        %651 = vmatprep.mubr.f32.mxu0 0.0
        %652 = vmatmul.mubr.f32.gmra.mrb[0].mxu0 %v446
        %v653 = vpop.f32.mrb[0].mxu0
        %v654 = vadd.f32 %v569, %v653
        %v655 = vpop.f32.mrb[0].mxu0
        %656 = vmatprep.mubr.f32.mxu0 0.0
        %657 = vmatmul.mubr.f32.gmra.mrb[0].mxu0 %v447
        %v658 = vpop.f32.mrb[0].mxu0
        %v659 = vadd.f32 %v574, %v658
        %v660 = vpop.f32.mrb[0].mxu0
        %661 = vmatprep.mubr.f32.mxu0 0.0
        %662 = vmatmul.mubr.f32.gmra.mrb[0].mxu0 %v448
        %v663 = vpop.f32.mrb[0].mxu0
        %v664 = vadd.f32 %v579, %v663
        %v665 = vpop.f32.mrb[0].mxu0
        %666 = vmatprep.mubr.f32.mxu0 0.0
        %667 = vmatmul.mubr.f32.gmra.mrb[0].mxu0 %v449
        %v668 = vpop.f32.mrb[0].mxu0
        %v669 = vadd.f32 %v584, %v668
        %v670 = vpop.f32.mrb[0].mxu0
        %671 = vdwg.mxu0
        %672 = vadd.xlane.f32.xlu0 %v654
        %v673 = vpop.xlane.xlu0 %672
        %674 = vadd.xlane.f32.xlu0 %v659
        %v675 = vpop.xlane.xlu0 %674
        %676 = vadd.xlane.f32.xlu0 %v664
        %v677 = vpop.xlane.xlu0 %676
        %678 = vadd.xlane.f32.xlu0 %v669
        %v679 = vpop.xlane.xlu0 %678
        %v680 = vrcp.pop 128.0
        %v681 = vmul.f32 %v673, %v680
        %v682 = vmul.f32 %v675, %v680
        %v683 = vmul.f32 %v677, %v680
        %v684 = vmul.f32 %v679, %v680
        %v685 = vsub.f32 %v654, %v681
        %v686 = vsub.f32 %v659, %v682
        %v687 = vsub.f32 %v664, %v683
        %v688 = vsub.f32 %v669, %v684
        %v689 = vmul.f32 %v685, %v685
        %v690 = vmul.f32 %v686, %v686
        %v691 = vmul.f32 %v687, %v687
        %v692 = vmul.f32 %v688, %v688
        %693 = vadd.xlane.f32.xlu0 %v689
        %v694 = vpop.xlane.xlu0 %693
        %695 = vadd.xlane.f32.xlu0 %v690
        %v696 = vpop.xlane.xlu0 %695
        %697 = vadd.xlane.f32.xlu0 %v691
        %v698 = vpop.xlane.xlu0 %697
        %699 = vadd.xlane.f32.xlu0 %v692
        %v700 = vpop.xlane.xlu0 %699
        %v701 = vmul.f32 %v694, %v680
        %v702 = vmul.f32 %v696, %v680
        %v703 = vmul.f32 %v698, %v680
        %v704 = vmul.f32 %v700, %v680
        %v705 = vadd.f32 %v701, 1e-08
        %v706 = vadd.f32 %v702, 1e-08
        %v707 = vadd.f32 %v703, 1e-08
        %v708 = vadd.f32 %v704, 1e-08
        %v709 = vrsqrt.pop %v705
        %v710 = vrsqrt.pop %v706
        %v711 = vrsqrt.pop %v707
        %v712 = vrsqrt.pop %v708
        %v713 = vmul.f32 %v685, %v709
        %v714 = vmul.f32 %v686, %v710
        %v715 = vmul.f32 %v687, %v711
        %v716 = vmul.f32 %v688, %v712
        %v717 = vlaneseq
        %v718 = vshrl.u32 %v717, 7
        %v719 = vsub.s32 1, %v718
        %v720 = vrot.slane %v432, %v719
        %v721 = vmul.f32 %v713, %v720
        %v722 = vmul.f32 %v714, %v720
        %v723 = vmul.f32 %v715, %v720
        %v724 = vmul.f32 %v716, %v720
        %v725 = vlaneseq
        %v726 = vshrl.u32 %v725, 7
        %v727 = vsub.s32 2, %v726
        %v728 = vrot.slane %v432, %v727
        %v729 = vadd.f32 %v721, %v728
        %v730 = vadd.f32 %v722, %v728
        %v731 = vadd.f32 %v723, %v728
        %v732 = vadd.f32 %v724, %v728
        %v733 = vmax.f32 %v729, 0.0
        %v734 = vmax.f32 %v730, 0.0
        %v735 = vmax.f32 %v731, 0.0
        %v736 = vmax.f32 %v732, 0.0
        %737 = vst [vmem:[#allocation3 + $0x8] sm:$0xff] %v733
        %738 = vst [vmem:[#allocation3 + $0x10] sm:$0xff] %v734
        %739 = vst [vmem:[#allocation3 + $0x20] sm:$0xff] %v735
        %740 = vst [vmem:[#allocation3 + $0x28] sm:$0xff] %v736
        %s741 = smul.u32 %s431, 4
        %s742 = ssub.s32 8, %s741
        %s743 = scalar_lea.vmem [#allocation3], %s742
        %v744 = vld [vmem:[%s743] sm:$0xff]
        %v745 = vld [vmem:[%s743 + $0x8] sm:$0xff]
        %v746 = vld [vmem:[%s743 + $0x18] sm:$0xff]
        %v747 = vld [vmem:[%s743 + $0x20] sm:$0xff]
        %s748 = scalar_lea.vmem [#allocation3], %s434
        %v749 = vld [vmem:[%s748] sm:$0xff]
        %v750 = vld [vmem:[%s748 + $0x8] sm:$0xff]
        %v751 = vld [vmem:[%s748 + $0x18] sm:$0xff]
        %v752 = vld [vmem:[%s748 + $0x20] sm:$0xff]
        %v753 = vld [vmem:[#allocation3 + $0x8] sm:$0xff]
        %v754 = vld [vmem:[#allocation3 + $0x10] sm:$0xff]
        %v755 = vld [vmem:[#allocation3 + $0x20] sm:$0xff]
        %v756 = vld [vmem:[#allocation3 + $0x28] sm:$0xff]
        %v757 = vld [vmem:[%s358] sm:$0xff]
        %v758 = vld [vmem:[%s358 + $0x8] sm:$0xff]
        %v759 = vld [vmem:[%s358 + $0x10] sm:$0xff]
        %v760 = vld [vmem:[%s358 + $0x18] sm:$0xff]
        %v761 = vld [vmem:[%s358 + $0x20] sm:$0xff]
        %v762 = vld [vmem:[%s358 + $0x28] sm:$0xff]
        %v763 = vld [vmem:[%s358 + $0x30] sm:$0xff]
        %v764 = vld [vmem:[%s358 + $0x38] sm:$0xff]
        %v765 = vld [vmem:[%s358 + $0x40] sm:$0xff]
        %v766 = vld [vmem:[%s358 + $0x48] sm:$0xff]
        %v767 = vld [vmem:[%s358 + $0x50] sm:$0xff]
        %v768 = vld [vmem:[%s358 + $0x58] sm:$0xff]
        %v769 = vld [vmem:[%s358 + $0x60] sm:$0xff]
        %v770 = vld [vmem:[%s358 + $0x68] sm:$0xff]
        %v771 = vld [vmem:[%s358 + $0x70] sm:$0xff]
        %v772 = vld [vmem:[%s358 + $0x78] sm:$0xff]
        %v773 = vld [vmem:[%s358 + $0x80] sm:$0xff]
        %v774 = vld [vmem:[%s358 + $0x88] sm:$0xff]
        %v775 = vld [vmem:[%s358 + $0x90] sm:$0xff]
        %v776 = vld [vmem:[%s358 + $0x98] sm:$0xff]
        %v777 = vld [vmem:[%s358 + $0xa0] sm:$0xff]
        %v778 = vld [vmem:[%s358 + $0xa8] sm:$0xff]
        %v779 = vld [vmem:[%s358 + $0xb0] sm:$0xff]
        %v780 = vld [vmem:[%s358 + $0xb8] sm:$0xff]
        %v781 = vld [vmem:[%s358 + $0xc0] sm:$0xff]
        %v782 = vld [vmem:[%s358 + $0xc8] sm:$0xff]
        %v783 = vld [vmem:[%s358 + $0xd0] sm:$0xff]
        %v784 = vld [vmem:[%s358 + $0xd8] sm:$0xff]
        %v785 = vld [vmem:[%s358 + $0xe0] sm:$0xff]
        %v786 = vld [vmem:[%s358 + $0xe8] sm:$0xff]
        %v787 = vld [vmem:[%s358 + $0xf0] sm:$0xff]
        %v788 = vld [vmem:[%s358 + $0xf8] sm:$0xff]
        %v789 = vld [vmem:[%s358 + $0x100] sm:$0xff]
        %v790 = vld [vmem:[%s358 + $0x108] sm:$0xff]
        %v791 = vld [vmem:[%s358 + $0x110] sm:$0xff]
        %v792 = vld [vmem:[%s358 + $0x118] sm:$0xff]
        %v793 = vld [vmem:[%s358 + $0x120] sm:$0xff]
        %v794 = vld [vmem:[%s358 + $0x128] sm:$0xff]
        %v795 = vld [vmem:[%s358 + $0x130] sm:$0xff]
        %v796 = vld [vmem:[%s358 + $0x138] sm:$0xff]
        %v797 = vld [vmem:[%s358 + $0x140] sm:$0xff]
        %v798 = vld [vmem:[%s358 + $0x148] sm:$0xff]
        %v799 = vld [vmem:[%s358 + $0x150] sm:$0xff]
        %v800 = vld [vmem:[%s358 + $0x158] sm:$0xff]
        %v801 = vld [vmem:[%s358 + $0x160] sm:$0xff]
        %v802 = vld [vmem:[%s358 + $0x168] sm:$0xff]
        %v803 = vld [vmem:[%s358 + $0x170] sm:$0xff]
        %v804 = vld [vmem:[%s358 + $0x178] sm:$0xff]
        %v805 = vlaneseq
        %v806 = vshrl.u32 %v805, 7
        %v807 = vsub.s32 3, %v806
        %v808 = vrot.slane %v432, %v807
        %809 = vmatprep.subr.mxu0 0.0
        %810 = vmatpush1.msra.mxu0 %v757
        %811 = vmatprep.subr.mxu0 0.0
        %812 = vmatpush1.msra.mxu0 %v758
        %813 = vmatprep.subr.mxu0 0.0
        %814 = vmatpush1.msra.mxu0 %v759
        %815 = vmatprep.subr.mxu0 0.0
        %816 = vmatpush1.msra.mxu0 %v760
        %817 = vmatprep.subr.mxu0 0.0
        %818 = vmatpush1.msra.mxu0 %v761
        %819 = vmatprep.subr.mxu0 0.0
        %820 = vmatpush1.msra.mxu0 %v762
        %821 = vmatprep.subr.mxu0 0.0
        %822 = vmatpush1.msra.mxu0 %v763
        %823 = vmatprep.subr.mxu0 0.0
        %824 = vmatpush1.msra.mxu0 %v764
        %825 = vmatprep.subr.mxu0 0.0
        %826 = vmatpush1.msra.mxu0 %v765
        %827 = vmatprep.subr.mxu0 0.0
        %828 = vmatpush1.msra.mxu0 %v766
        %829 = vmatprep.subr.mxu0 0.0
        %830 = vmatpush1.msra.mxu0 %v767
        %831 = vmatprep.subr.mxu0 0.0
        %832 = vmatpush1.msra.mxu0 %v768
        %833 = vmatprep.subr.mxu0 0.0
        %834 = vmatpush1.msra.mxu0 %v769
        %835 = vmatprep.subr.mxu0 0.0
        %836 = vmatpush1.msra.mxu0 %v770
        %837 = vmatprep.subr.mxu0 0.0
        %838 = vmatpush1.msra.mxu0 %v771
        %839 = vmatprep.subr.mxu0 0.0
        %840 = vmatpush1.msra.mxu0 %v772
        %841 = vmatprep.subr.mxu0 0.0
        %842 = vmatpush1.msra.mxu0 %v773
        %843 = vmatprep.subr.mxu0 0.0
        %844 = vmatpush1.msra.mxu0 %v774
        %845 = vmatprep.subr.mxu0 0.0
        %846 = vmatpush1.msra.mxu0 %v775
        %847 = vmatprep.subr.mxu0 0.0
        %848 = vmatpush1.msra.mxu0 %v776
        %849 = vmatprep.subr.mxu0 0.0
        %850 = vmatpush1.msra.mxu0 %v777
        %851 = vmatprep.subr.mxu0 0.0
        %852 = vmatpush1.msra.mxu0 %v778
        %853 = vmatprep.subr.mxu0 0.0
        %854 = vmatpush1.msra.mxu0 %v779
        %855 = vmatprep.subr.mxu0 0.0
        %856 = vmatpush1.msra.mxu0 %v780
        %857 = vmatprep.subr.mxu0 0.0
        %858 = vmatpush1.msra.mxu0 %v781
        %859 = vmatprep.subr.mxu0 0.0
        %860 = vmatpush1.msra.mxu0 %v782
        %861 = vmatprep.subr.mxu0 0.0
        %862 = vmatpush1.msra.mxu0 %v783
        %863 = vmatprep.subr.mxu0 0.0
        %864 = vmatpush1.msra.mxu0 %v784
        %865 = vmatprep.subr.mxu0 0.0
        %866 = vmatpush1.msra.mxu0 %v785
        %867 = vmatprep.subr.mxu0 0.0
        %868 = vmatpush1.msra.mxu0 %v786
        %869 = vmatprep.subr.mxu0 0.0
        %870 = vmatpush1.msra.mxu0 %v787
        %871 = vmatprep.subr.mxu0 0.0
        %872 = vmatpush1.msra.mxu0 %v788
        %873 = vmatprep.mubr.f32.mxu0 %v749
        %874 = vmatmul.mubr.f32.gmra.mrb[0].mxu0 %v744
        %v875 = vpop.f32.mrb[0].mxu0
        %v876 = vadd.f32 %v808, %v875
        %v877 = vpop.f32.mrb[0].mxu0
        %878 = vmatprep.mubr.f32.mxu0 %v750
        %879 = vmatmul.mubr.f32.gmra.mrb[0].mxu0 %v745
        %v880 = vpop.f32.mrb[0].mxu0
        %v881 = vadd.f32 %v808, %v880
        %v882 = vpop.f32.mrb[0].mxu0
        %883 = vmatprep.mubr.f32.mxu0 %v751
        %884 = vmatmul.mubr.f32.gmra.mrb[0].mxu0 %v746
        %v885 = vpop.f32.mrb[0].mxu0
        %v886 = vadd.f32 %v808, %v885
        %v887 = vpop.f32.mrb[0].mxu0
        %888 = vmatprep.mubr.f32.mxu0 %v752
        %889 = vmatmul.mubr.f32.gmra.mrb[0].mxu0 %v747
        %v890 = vpop.f32.mrb[0].mxu0
        %v891 = vadd.f32 %v808, %v890
        %v892 = vpop.f32.mrb[0].mxu0
        %893 = vdwg.mxu0
        %894 = vmatprep.subr.mxu0 0.0
        %895 = vmatpush1.msra.mxu0 %v789
        %896 = vmatprep.subr.mxu0 0.0
        %897 = vmatpush1.msra.mxu0 %v790
        %898 = vmatprep.subr.mxu0 0.0
        %899 = vmatpush1.msra.mxu0 %v791
        %900 = vmatprep.subr.mxu0 0.0
        %901 = vmatpush1.msra.mxu0 %v792
        %902 = vmatprep.subr.mxu0 0.0
        %903 = vmatpush1.msra.mxu0 %v793
        %904 = vmatprep.subr.mxu0 0.0
        %905 = vmatpush1.msra.mxu0 %v794
        %906 = vmatprep.subr.mxu0 0.0
        %907 = vmatpush1.msra.mxu0 %v795
        %908 = vmatprep.subr.mxu0 0.0
        %909 = vmatpush1.msra.mxu0 %v796
        %910 = vmatprep.subr.mxu0 0.0
        %911 = vmatpush1.msra.mxu0 %v797
        %912 = vmatprep.subr.mxu0 0.0
        %913 = vmatpush1.msra.mxu0 %v798
        %914 = vmatprep.subr.mxu0 0.0
        %915 = vmatpush1.msra.mxu0 %v799
        %916 = vmatprep.subr.mxu0 0.0
        %917 = vmatpush1.msra.mxu0 %v800
        %918 = vmatprep.subr.mxu0 0.0
        %919 = vmatpush1.msra.mxu0 %v801
        %920 = vmatprep.subr.mxu0 0.0
        %921 = vmatpush1.msra.mxu0 %v802
        %922 = vmatprep.subr.mxu0 0.0
        %923 = vmatpush1.msra.mxu0 %v803
        %924 = vmatprep.subr.mxu0 0.0
        %925 = vmatpush1.msra.mxu0 %v804
        %926 = vmatprep.subr.mxu0 0.0
        %927 = vmatpush1.msra.mxu0 0.0
        %928 = vmatprep.subr.mxu0 0.0
        %929 = vmatpush1.msra.mxu0 0.0
        %930 = vmatprep.subr.mxu0 0.0
        %931 = vmatpush1.msra.mxu0 0.0
        %932 = vmatprep.subr.mxu0 0.0
        %933 = vmatpush1.msra.mxu0 0.0
        %934 = vmatprep.subr.mxu0 0.0
        %935 = vmatpush1.msra.mxu0 0.0
        %936 = vmatprep.subr.mxu0 0.0
        %937 = vmatpush1.msra.mxu0 0.0
        %938 = vmatprep.subr.mxu0 0.0
        %939 = vmatpush1.msra.mxu0 0.0
        %940 = vmatprep.subr.mxu0 0.0
        %941 = vmatpush1.msra.mxu0 0.0
        %942 = vmatprep.subr.mxu0 0.0
        %943 = vmatpush1.msra.mxu0 0.0
        %944 = vmatprep.subr.mxu0 0.0
        %945 = vmatpush1.msra.mxu0 0.0
        %946 = vmatprep.subr.mxu0 0.0
        %947 = vmatpush1.msra.mxu0 0.0
        %948 = vmatprep.subr.mxu0 0.0
        %949 = vmatpush1.msra.mxu0 0.0
        %950 = vmatprep.subr.mxu0 0.0
        %951 = vmatpush1.msra.mxu0 0.0
        %952 = vmatprep.subr.mxu0 0.0
        %953 = vmatpush1.msra.mxu0 0.0
        %954 = vmatprep.subr.mxu0 0.0
        %955 = vmatpush1.msra.mxu0 0.0
        %956 = vmatprep.subr.mxu0 0.0
        %957 = vmatpush1.msra.mxu0 0.0
        %958 = vmatprep.mubr.f32.mxu0 0.0
        %959 = vmatmul.mubr.f32.gmra.mrb[0].mxu0 %v753
        %v960 = vpop.f32.mrb[0].mxu0
        %v961 = vadd.f32 %v876, %v960
        %v962 = vpop.f32.mrb[0].mxu0
        %963 = vmatprep.mubr.f32.mxu0 0.0
        %964 = vmatmul.mubr.f32.gmra.mrb[0].mxu0 %v754
        %v965 = vpop.f32.mrb[0].mxu0
        %v966 = vadd.f32 %v881, %v965
        %v967 = vpop.f32.mrb[0].mxu0
        %968 = vmatprep.mubr.f32.mxu0 0.0
        %969 = vmatmul.mubr.f32.gmra.mrb[0].mxu0 %v755
        %v970 = vpop.f32.mrb[0].mxu0
        %v971 = vadd.f32 %v886, %v970
        %v972 = vpop.f32.mrb[0].mxu0
        %973 = vmatprep.mubr.f32.mxu0 0.0
        %974 = vmatmul.mubr.f32.gmra.mrb[0].mxu0 %v756
        %v975 = vpop.f32.mrb[0].mxu0
        %v976 = vadd.f32 %v891, %v975
        %v977 = vpop.f32.mrb[0].mxu0
        %978 = vdwg.mxu0
        %979 = vadd.xlane.f32.xlu0 %v961
        %v980 = vpop.xlane.xlu0 %979
        %981 = vadd.xlane.f32.xlu0 %v966
        %v982 = vpop.xlane.xlu0 %981
        %983 = vadd.xlane.f32.xlu0 %v971
        %v984 = vpop.xlane.xlu0 %983
        %985 = vadd.xlane.f32.xlu0 %v976
        %v986 = vpop.xlane.xlu0 %985
        %v987 = vmul.f32 %v980, %v680
        %v988 = vmul.f32 %v982, %v680
        %v989 = vmul.f32 %v984, %v680
        %v990 = vmul.f32 %v986, %v680
        %v991 = vsub.f32 %v961, %v987
        %v992 = vsub.f32 %v966, %v988
        %v993 = vsub.f32 %v971, %v989
        %v994 = vsub.f32 %v976, %v990
        %v995 = vmul.f32 %v991, %v991
        %v996 = vmul.f32 %v992, %v992
        %v997 = vmul.f32 %v993, %v993
        %v998 = vmul.f32 %v994, %v994
        %999 = vadd.xlane.f32.xlu0 %v995
        %v1000 = vpop.xlane.xlu0 %999
        %1001 = vadd.xlane.f32.xlu0 %v996
        %v1002 = vpop.xlane.xlu0 %1001
        %1003 = vadd.xlane.f32.xlu0 %v997
        %v1004 = vpop.xlane.xlu0 %1003
        %1005 = vadd.xlane.f32.xlu0 %v998
        %v1006 = vpop.xlane.xlu0 %1005
        %v1007 = vmul.f32 %v1000, %v680
        %v1008 = vmul.f32 %v1002, %v680
        %v1009 = vmul.f32 %v1004, %v680
        %v1010 = vmul.f32 %v1006, %v680
        %v1011 = vadd.f32 %v1007, 1e-08
        %v1012 = vadd.f32 %v1008, 1e-08
        %v1013 = vadd.f32 %v1009, 1e-08
        %v1014 = vadd.f32 %v1010, 1e-08
        %v1015 = vrsqrt.pop %v1011
        %v1016 = vrsqrt.pop %v1012
        %v1017 = vrsqrt.pop %v1013
        %v1018 = vrsqrt.pop %v1014
        %v1019 = vmul.f32 %v991, %v1015
        %v1020 = vmul.f32 %v992, %v1016
        %v1021 = vmul.f32 %v993, %v1017
        %v1022 = vmul.f32 %v994, %v1018
        %v1023 = vlaneseq
        %v1024 = vshrl.u32 %v1023, 7
        %v1025 = vsub.s32 4, %v1024
        %v1026 = vrot.slane %v432, %v1025
        %v1027 = vmul.f32 %v1019, %v1026
        %v1028 = vmul.f32 %v1020, %v1026
        %v1029 = vmul.f32 %v1021, %v1026
        %v1030 = vmul.f32 %v1022, %v1026
        %v1031 = vlaneseq
        %v1032 = vshrl.u32 %v1031, 7
        %v1033 = vsub.s32 5, %v1032
        %v1034 = vrot.slane %v432, %v1033
        %v1035 = vadd.f32 %v1027, %v1034
        %v1036 = vadd.f32 %v1028, %v1034
        %v1037 = vadd.f32 %v1029, %v1034
        %v1038 = vadd.f32 %v1030, %v1034
        %v1039 = vmax.f32 %v1035, 0.0
        %v1040 = vmax.f32 %v1036, 0.0
        %v1041 = vmax.f32 %v1037, 0.0
        %v1042 = vmax.f32 %v1038, 0.0
        %v1043 = vld [vmem:[#allocation2 + $0x8] sm:$0xff]
        %v1044 = vld [vmem:[#allocation2 + $0x10] sm:$0xff]
        %v1045 = vld [vmem:[#allocation2 + $0x20] sm:$0xff]
        %v1046 = vld [vmem:[#allocation2 + $0x28] sm:$0xff]
        %v1047 = vlaneseq
        %v1048 = vshrl.u32 %v1047, 7
        %v1049 = vsub.s32 6, %v1048
        %v1050 = vrot.slane %v432, %v1049
        %v1051 = vmul.f32 %v1050, %v1039
        %v1052 = vmul.f32 %v1050, %v1040
        %v1053 = vmul.f32 %v1050, %v1041
        %v1054 = vmul.f32 %v1050, %v1042
        %v1055 = vadd.f32 %v1051, %v1043
        %v1056 = vadd.f32 %v1052, %v1044
        %v1057 = vadd.f32 %v1053, %v1045
        %v1058 = vadd.f32 %v1054, %v1046
        %1059 = vst [vmem:[#allocation2 + $0x8] sm:$0xff] %v1055
        %1060 = vst [vmem:[#allocation2 + $0x10] sm:$0xff] %v1056
        %1061 = vst [vmem:[#allocation2 + $0x20] sm:$0xff] %v1057
        %1062 = vst [vmem:[#allocation2 + $0x28] sm:$0xff] %v1058
        %p1063 = scmp.eq.s32.totalorder %s39, 1
        // Predicated region
        $region69: #{tpu_custom_call.1} parent=43 // pred_check
          %p1064 = pneg %p1063
        $region70: #{tpu_custom_call.1} parent=43 // pred_check_branch
          %1066 = sbr.rel (%p1064) target = $region72
        $region71: #{tpu_custom_call.1} parent=43 // pred_region
          %v1067 = vld [vmem:[#allocation14] sm:$0xff]
          %v1068 = vld [vmem:[#allocation14 + $0x8] sm:$0xff]
          %v1069 = vld [vmem:[#allocation14 + $0x10] sm:$0xff]
          %v1070 = vld [vmem:[#allocation14 + $0x18] sm:$0xff]
          %v1071 = vld [vmem:[#allocation14 + $0x20] sm:$0xff]
          %v1072 = vld [vmem:[#allocation14 + $0x28] sm:$0xff]
          %v1073 = vld [vmem:[#allocation14 + $0x30] sm:$0xff]
          %v1074 = vld [vmem:[#allocation14 + $0x38] sm:$0xff]
          %v1075 = vld [vmem:[#allocation14 + $0x40] sm:$0xff]
          %v1076 = vld [vmem:[#allocation14 + $0x48] sm:$0xff]
          %v1077 = vld [vmem:[#allocation14 + $0x50] sm:$0xff]
          %v1078 = vld [vmem:[#allocation14 + $0x58] sm:$0xff]
          %v1079 = vld [vmem:[#allocation14 + $0x60] sm:$0xff]
          %v1080 = vld [vmem:[#allocation14 + $0x68] sm:$0xff]
          %v1081 = vld [vmem:[#allocation14 + $0x70] sm:$0xff]
          %v1082 = vld [vmem:[#allocation14 + $0x78] sm:$0xff]
          %v1083 = vld [vmem:[%s6] sm:$0x1]
          %v1085 = vlaneseq
          %v1086 = vshrl.u32 %v1085, 7
          %v1087 = vsub.s32 0, %v1086
          %v1088 = vrot.slane %v1083, %v1087
          %1090 = vmatprep.subr.mxu0 0.0
          %1091 = vmatpush1.msra.mxu0 %v1067
          %1092 = vmatprep.subr.mxu0 0.0
          %1093 = vmatpush1.msra.mxu0 %v1068
          %1094 = vmatprep.subr.mxu0 0.0
          %1095 = vmatpush1.msra.mxu0 %v1069
          %1096 = vmatprep.subr.mxu0 0.0
          %1097 = vmatpush1.msra.mxu0 %v1070
          %1098 = vmatprep.subr.mxu0 0.0
          %1099 = vmatpush1.msra.mxu0 %v1071
          %1100 = vmatprep.subr.mxu0 0.0
          %1101 = vmatpush1.msra.mxu0 %v1072
          %1102 = vmatprep.subr.mxu0 0.0
          %1103 = vmatpush1.msra.mxu0 %v1073
          %1104 = vmatprep.subr.mxu0 0.0
          %1105 = vmatpush1.msra.mxu0 %v1074
          %1106 = vmatprep.subr.mxu0 0.0
          %1107 = vmatpush1.msra.mxu0 %v1075
          %1108 = vmatprep.subr.mxu0 0.0
          %1109 = vmatpush1.msra.mxu0 %v1076
          %1110 = vmatprep.subr.mxu0 0.0
          %1111 = vmatpush1.msra.mxu0 %v1077
          %1112 = vmatprep.subr.mxu0 0.0
          %1113 = vmatpush1.msra.mxu0 %v1078
          %1114 = vmatprep.subr.mxu0 0.0
          %1115 = vmatpush1.msra.mxu0 %v1079
          %1116 = vmatprep.subr.mxu0 0.0
          %1117 = vmatpush1.msra.mxu0 %v1080
          %1118 = vmatprep.subr.mxu0 0.0
          %1119 = vmatpush1.msra.mxu0 %v1081
          %1120 = vmatprep.subr.mxu0 0.0
          %1121 = vmatpush1.msra.mxu0 %v1082
          %1122 = vmatprep.subr.mxu0 0.0
          %1123 = vmatpush1.msra.mxu0 0.0
          %1124 = vmatprep.subr.mxu0 0.0
          %1125 = vmatpush1.msra.mxu0 0.0
          %1126 = vmatprep.subr.mxu0 0.0
          %1127 = vmatpush1.msra.mxu0 0.0
          %1128 = vmatprep.subr.mxu0 0.0
          %1129 = vmatpush1.msra.mxu0 0.0
          %1130 = vmatprep.subr.mxu0 0.0
          %1131 = vmatpush1.msra.mxu0 0.0
          %1132 = vmatprep.subr.mxu0 0.0
          %1133 = vmatpush1.msra.mxu0 0.0
          %1134 = vmatprep.subr.mxu0 0.0
          %1135 = vmatpush1.msra.mxu0 0.0
          %1136 = vmatprep.subr.mxu0 0.0
          %1137 = vmatpush1.msra.mxu0 0.0
          %1138 = vmatprep.subr.mxu0 0.0
          %1139 = vmatpush1.msra.mxu0 0.0
          %1140 = vmatprep.subr.mxu0 0.0
          %1141 = vmatpush1.msra.mxu0 0.0
          %1142 = vmatprep.subr.mxu0 0.0
          %1143 = vmatpush1.msra.mxu0 0.0
          %1144 = vmatprep.subr.mxu0 0.0
          %1145 = vmatpush1.msra.mxu0 0.0
          %1146 = vmatprep.subr.mxu0 0.0
          %1147 = vmatpush1.msra.mxu0 0.0
          %1148 = vmatprep.subr.mxu0 0.0
          %1149 = vmatpush1.msra.mxu0 0.0
          %1150 = vmatprep.subr.mxu0 0.0
          %1151 = vmatpush1.msra.mxu0 0.0
          %1152 = vmatprep.subr.mxu0 0.0
          %1153 = vmatpush1.msra.mxu0 0.0
          %1154 = vmatprep.mubr.f32.mxu0 0.0
          %1155 = vmatmul.mubr.f32.gmra.mrb[0].mxu0 %v1055
          %v1156 = vpop.f32.mrb[0].mxu0
          %v1157 = vadd.f32 %v1088, %v1156
          %v1158 = vpop.f32.mrb[0].mxu0
          %1159 = vmatprep.mubr.f32.mxu0 0.0
          %1160 = vmatmul.mubr.f32.gmra.mrb[0].mxu0 %v1056
          %v1161 = vpop.f32.mrb[0].mxu0
          %v1162 = vadd.f32 %v1088, %v1161
          %v1163 = vpop.f32.mrb[0].mxu0
          %1164 = vmatprep.mubr.f32.mxu0 0.0
          %1165 = vmatmul.mubr.f32.gmra.mrb[0].mxu0 %v1057
          %v1166 = vpop.f32.mrb[0].mxu0
          %v1167 = vadd.f32 %v1088, %v1166
          %v1168 = vpop.f32.mrb[0].mxu0
          %1169 = vmatprep.mubr.f32.mxu0 0.0
          %1170 = vmatmul.mubr.f32.gmra.mrb[0].mxu0 %v1058
          %v1171 = vpop.f32.mrb[0].mxu0
          %v1172 = vadd.f32 %v1088, %v1171
          %v1173 = vpop.f32.mrb[0].mxu0
          %1174 = vdwg.mxu0
          %1175 = vst [vmem:[%s414] sm:$0xff] %v1157
          %1176 = vst [vmem:[%s414 + $0x8] sm:$0xff] %v1162
          %1177 = vst [vmem:[%s414 + $0x10] sm:$0xff] %v1167
          %1178 = vst [vmem:[%s414 + $0x18] sm:$0xff] %v1172
        $region72: #{tpu_custom_call.1} parent=43 // pred_fallthru
          _
        %s1179 = sand.u32 %s200, 1
        %s1180 = scalar_lea.sflag [#allocation8], %s1179
        %s1181 = sand.u32 %s200, 1
        %s1182 = smul.addr %s1181, 32
        %s1183 = scalar_lea.vmem [#allocation15], %s1182
        // Predicated region
        $region73: #{tpu_custom_call.1} parent=43 // pred_check
          %p1184 = pneg %p210
        $region74: #{tpu_custom_call.1} parent=43 // pred_check_branch
          %1186 = sbr.rel (%p1184) target = $region76
        $region75: #{tpu_custom_call.1} parent=43 // pred_region
          %s1188 = ssub.s32 512, 512
          %1189 = vsyncadd %s1180, %s1188
          %s1190 = smul.addr %s38, 4
          %s1191 = smul.addr %s1190, 128
          %s1192 = scalar_lea.hbm %s7, %s1191
          %s1193 = sshll.u32 %s1183, 4
          %s1194 = int_to_ptr.vmem [resolvable:$true] %s1193
          %1199 = dma.vmem_to_hbm [thread:$0]  %s1194, 512, %s1192, %s1180, 128, 128, 8
        $region76: #{tpu_custom_call.1} parent=43 // pred_fallthru
          _
      $region44: #{tpu_custom_call.1} parent=5 // pred_fallthru
        _
      %p1200 = scmp.le.s32.totalorder 2, %s29
      // Predicated region
      $region77: #{tpu_custom_call.1} parent=5 // pred_check
        %p1201 = pneg %p1200
      $region78: #{tpu_custom_call.1} parent=5 // pred_check_branch
        %1203 = sbr.rel (%p1201) target = $region80
      $region79: #{tpu_custom_call.1} parent=5 // pred_region
        %s1204 = ssub.s32 %s29, 2
        // Predicated region
        $region81: #{tpu_custom_call.1} parent=79 // pred_check
          %p1205 = pneg %p216
        $region82: #{tpu_custom_call.1} parent=79 // pred_check_branch
          %1207 = sbr.rel (%p1205) target = $region84
        $region83: #{tpu_custom_call.1} parent=79 // pred_region
          %s1208 = sand.u32 %s201, 1
          %s1209 = scalar_lea.sflag [#allocation8], %s1208
          %s1210 = sand.u32 %s201, 1
          %s1211 = smul.addr %s1210, 32
          %s1212 = scalar_lea.vmem [#allocation15], %s1211
          %1213 = dma.done %s1209, 512
        $region84: #{tpu_custom_call.1} parent=79 // pred_fallthru
          _
      $region80: #{tpu_custom_call.1} parent=5 // pred_fallthru
        _
    $region6: #{tpu_custom_call.1} parent=1 // loop_footer
      %s33 = sadd.s32 1, %s29
    $region7: #{tpu_custom_call.1} parent=1 // loop_footer_branch
      %28 = sbr.rel target = $region3
    $region8: #{tpu_custom_call.1} parent=1 // loop_exit
      _
    %1214 = vsyncpa [#allocation7], 1
    %s1215 = scalar_lea.sflag [#allocation7], 1
    %1216 = vsyncpa %s1215, 1
    %1217 = vsyncpa [#allocation10], 1
    %s1218 = scalar_lea.sflag [#allocation10], 1
    %1219 = vsyncpa %s1218, 1
    %1220 = vsyncpa [#allocation13], 1
    %s1221 = scalar_lea.sflag [#allocation13], 1
    %1222 = vsyncpa %s1221, 1
    %1223 = vsyncpa [#allocation8], 1
    %s1224 = scalar_lea.sflag [#allocation8], 1
    %1225 = vsyncpa %s1224, 1

</llo_original>
